<compile_context>
chip_gen: v7x
topology: tpu7x:2x2x1
jax: 0.10.0
libtpu: 0.0.40
codegen_flags: <defaults>
</compile_context>

<pallas_src>
import functools
import math

import jax
import jax.numpy as jnp
from jax.experimental import pallas as pl
from jax.experimental.pallas import tpu as pltpu


def _mha_kernel(q_ref, k_ref, v_ref, wq_ref, wk_ref, wv_ref, wo_ref,
                out_ref, scores_ref, *, num_heads, head_dim):
    H, hd = num_heads, head_dim
    scale = jnp.float32(1.0 / math.sqrt(head_dim))

    x_q = q_ref[0]  # (S, D) bf16
    x_k = k_ref[0]
    x_v = v_ref[0]

    # Fused wide projections: one (S, D) @ (D, H*hd) matmul per input (bf16
    # operands, f32 accumulation on the MXU).
    q = jnp.dot(x_q, wq_ref[...], preferred_element_type=jnp.float32)  # (S, H*hd)
    k = jnp.dot(x_k, wk_ref[...], preferred_element_type=jnp.float32)
    v = jnp.dot(x_v, wv_ref[...], preferred_element_type=jnp.float32)

    q16 = q.astype(jnp.bfloat16)
    k16 = k.astype(jnp.bfloat16)
    v16 = v.astype(jnp.bfloat16)

    # Contract the last dims directly: (S, hd) x (S, hd) -> (S, S), no explicit
    # k.T materialization.
    qk_dims = (((1,), (1,)), ((), ()))

    ctx_parts = []
    for h in range(H):  # static unroll over heads
        lo = h * hd
        q_h = q16[:, lo:lo + hd]  # (S, hd)
        k_h = k16[:, lo:lo + hd]
        v_h = v16[:, lo:lo + hd]

        s = jax.lax.dot_general(q_h, k_h, qk_dims,
                                preferred_element_type=jnp.float32) * scale  # (S, S)

        # Numerically-stable softmax in f32 (matches F.softmax).
        m = jnp.max(s, axis=-1, keepdims=True)
        e = jnp.exp(s - m)
        denom = jnp.sum(e, axis=-1, keepdims=True)
        attn = e * pl.reciprocal(denom, approx=True)

        scores_ref[h, 0] = attn

        ctx_parts.append(
            jnp.dot(attn.astype(jnp.bfloat16), v_h,
                    preferred_element_type=jnp.float32))  # (S, hd)

    # Head-major concatenation -> (S, H*hd), then a single output-projection
    # matmul (K = H*hd) instead of H skinny K = hd matmuls + H output RMWs.
    ctx = jnp.concatenate(ctx_parts, axis=-1)
    out_ref[0] = jnp.dot(ctx.astype(jnp.bfloat16), wo_ref[...],
                         preferred_element_type=jnp.float32)


def multi_head_attention(query, key, value, wq, wk, wv, wo,
                         *, num_heads, head_dim):
    """query/key/value: (B, S, D) f32. wq/wk/wv: (H*hd, D), wo: (D, H*hd)
    PyTorch Linear weights. Returns (attn_values (B,S,D), attn_scores (H*B,S,S))."""
    B, S, D = query.shape
    H, hd = num_heads, head_dim
    HD = H * hd

    # Glue: fused, transposed weights.  Linear(x) = x @ W.T, and the H*hd axis
    # is already head-major (h, d) — matching the in-kernel per-head slices and
    # the PyTorch view/permute.
    wq_all = wq.T.astype(jnp.bfloat16)   # (D, H*hd)
    wk_all = wk.T.astype(jnp.bfloat16)   # (D, H*hd)
    wv_all = wv.T.astype(jnp.bfloat16)   # (D, H*hd)
    wo_all = wo.T.astype(jnp.bfloat16)   # (H*hd, D)

    q_b = query.astype(jnp.bfloat16)
    k_b = key.astype(jnp.bfloat16)
    v_b = value.astype(jnp.bfloat16)

    kernel = functools.partial(_mha_kernel, num_heads=H, head_dim=hd)

    out, scores = pl.pallas_call(
        kernel,
        out_shape=(
            jax.ShapeDtypeStruct((B, S, D), jnp.float32),
            jax.ShapeDtypeStruct((H, B, S, S), jnp.float32),
        ),
        grid_spec=pltpu.PrefetchScalarGridSpec(
            num_scalar_prefetch=0,
            grid=(B,),
            in_specs=[
                pl.BlockSpec((1, S, D), lambda b: (b, 0, 0)),   # query
                pl.BlockSpec((1, S, D), lambda b: (b, 0, 0)),   # key
                pl.BlockSpec((1, S, D), lambda b: (b, 0, 0)),   # value
                # Grid-resident fused weights: constant block index -> fetched once.
                pl.BlockSpec((D, HD), lambda b: (0, 0)),        # wq (all heads)
                pl.BlockSpec((D, HD), lambda b: (0, 0)),        # wk
                pl.BlockSpec((D, HD), lambda b: (0, 0)),        # wv
                pl.BlockSpec((HD, D), lambda b: (0, 0)),        # wo
            ],
            out_specs=[
                pl.BlockSpec((1, S, D), lambda b: (b, 0, 0)),         # attn_values
                pl.BlockSpec((H, 1, S, S), lambda b: (0, b, 0, 0)),   # attn probs
            ],
        ),
        compiler_params=pltpu.CompilerParams(
            dimension_semantics=("parallel",),
            vmem_limit_bytes=64 * 1024 * 1024,
        ),
    )(q_b, k_b, v_b, wq_all, wk_all, wv_all, wo_all)

    # PyTorch flattens scores head-major: flat index = h*B + b.
    return out, scores.reshape(H * B, S, S)


def _reference(query, key, value, wq, wk, wv, wo, *, num_heads, head_dim):
    B, S, D = query.shape
    H, hd = num_heads, head_dim

    def proj(x, w):
        y = x @ w.T                                            # (B, S, H*hd)
        y = y.reshape(B, S, H, hd).transpose(2, 0, 1, 3)       # (H, B, S, hd)
        return y.reshape(H * B, S, hd)

    q = proj(query, wq)
    k = proj(key, wk)
    v = proj(value, wv)
    s = jnp.einsum("nqd,nkd->nqk", q, k) / jnp.sqrt(jnp.float32(hd))
    attn = jax.nn.softmax(s, axis=-1)
    ctx = jnp.einsum("nqk,nkd->nqd", attn, v)                  # (H*B, S, hd)
    ctx = ctx.reshape(H, B, S, hd).transpose(1, 2, 0, 3).reshape(B, S, H * hd)
    out = ctx @ wo.T
    return out, attn


if __name__ == "__main__":
    B, S, D = 2, 8, 32
    H, hd = 4, 8

    key0 = jax.random.PRNGKey(0)
    k1, k2, k3, k4, k5, k6, k7 = jax.random.split(key0, 7)

    query = jax.random.normal(k1, (B, S, D), jnp.float32)
    key_in = jax.random.normal(k2, (B, S, D), jnp.float32)
    value = jax.random.normal(k3, (B, S, D), jnp.float32)

    # Deterministic parameter init (PyTorch Linear weight shapes: (out, in)).
    wq = jax.random.normal(k4, (H * hd, D), jnp.float32) * 0.1
    wk = jax.random.normal(k5, (H * hd, D), jnp.float32) * 0.1
    wv = jax.random.normal(k6, (H * hd, D), jnp.float32) * 0.1
    wo = jax.random.normal(k7, (D, H * hd), jnp.float32) * 0.1

    out, scores = multi_head_attention(
        query, key_in, value, wq, wk, wv, wo, num_heads=H, head_dim=hd)
    out = jax.block_until_ready(out)
    scores = jax.block_until_ready(scores)

    ref_out, ref_scores = _reference(
        query, key_in, value, wq, wk, wv, wo, num_heads=H, head_dim=hd)

    assert out.shape == (B, S, D)
    assert scores.shape == (H * B, S, S)
    # bf16 MXU operands (f32 accumulation) -> tolerances relaxed vs the pure-f32
    # reference.
    assert jnp.allclose(out, ref_out, atol=5e-2, rtol=5e-2), \
        float(jnp.max(jnp.abs(out - ref_out)))
    assert jnp.allclose(scores, ref_scores, atol=3e-2, rtol=3e-2), \
        float(jnp.max(jnp.abs(scores - ref_scores)))

    print("KERNEL_OK")
</pallas_src>

<mosaic_0001>
module attributes {stable_mosaic.version = 11 : i64} {
  func.func @_mha_kernel(%arg0: i32, %arg1: memref<1x8x32xbf16, #tpu.memory_space<vmem>>, %arg2: memref<1x8x32xbf16, #tpu.memory_space<vmem>>, %arg3: memref<1x8x32xbf16, #tpu.memory_space<vmem>>, %arg4: memref<32x32xbf16, #tpu.memory_space<vmem>>, %arg5: memref<32x32xbf16, #tpu.memory_space<vmem>>, %arg6: memref<32x32xbf16, #tpu.memory_space<vmem>>, %arg7: memref<32x32xbf16, #tpu.memory_space<vmem>>, %arg8: memref<1x8x32xf32, #tpu.memory_space<vmem>>, %arg9: memref<4x1x8x8xf32, #tpu.memory_space<vmem>>) attributes {dimension_semantics = [#tpu.dimension_semantics<parallel>], iteration_bounds = array<i64: 2>, scalar_prefetch = 0 : i64, scratch_operands = 0 : i64, tpu.core_type = #tpu.core_type<tc>, window_params = [{transform_indices = @transform_0, window_bounds = array<i64: 1, 8, 32>}, {transform_indices = @transform_1, window_bounds = array<i64: 1, 8, 32>}, {transform_indices = @transform_2, window_bounds = array<i64: 1, 8, 32>}, {pipeline_mode = #tpu.pipeline_mode<synchronous>, transform_indices = @transform_3, window_bounds = array<i64: 32, 32>}, {pipeline_mode = #tpu.pipeline_mode<synchronous>, transform_indices = @transform_4, window_bounds = array<i64: 32, 32>}, {pipeline_mode = #tpu.pipeline_mode<synchronous>, transform_indices = @transform_5, window_bounds = array<i64: 32, 32>}, {pipeline_mode = #tpu.pipeline_mode<synchronous>, transform_indices = @transform_6, window_bounds = array<i64: 32, 32>}, {transform_indices = @transform_7, window_bounds = array<i64: 1, 8, 32>}, {transform_indices = @transform_8, window_bounds = array<i64: 4, 1, 8, 8>}]} {
    %c0 = arith.constant 0 : index
    %c0_0 = arith.constant 0 : index
    %c0_1 = arith.constant 0 : index
    %0 = vector.load %arg1[%c0, %c0_0, %c0_1] : memref<1x8x32xbf16, #tpu.memory_space<vmem>>, vector<1x8x32xbf16>
    %1 = vector.shape_cast %0 : vector<1x8x32xbf16> to vector<8x32xbf16>
    %c0_2 = arith.constant 0 : index
    %c0_3 = arith.constant 0 : index
    %c0_4 = arith.constant 0 : index
    %2 = vector.load %arg2[%c0_2, %c0_3, %c0_4] : memref<1x8x32xbf16, #tpu.memory_space<vmem>>, vector<1x8x32xbf16>
    %3 = vector.shape_cast %2 : vector<1x8x32xbf16> to vector<8x32xbf16>
    %c0_5 = arith.constant 0 : index
    %c0_6 = arith.constant 0 : index
    %c0_7 = arith.constant 0 : index
    %4 = vector.load %arg3[%c0_5, %c0_6, %c0_7] : memref<1x8x32xbf16, #tpu.memory_space<vmem>>, vector<1x8x32xbf16>
    %5 = vector.shape_cast %4 : vector<1x8x32xbf16> to vector<8x32xbf16>
    %c0_8 = arith.constant 0 : index
    %c0_9 = arith.constant 0 : index
    %6 = vector.load %arg4[%c0_8, %c0_9] : memref<32x32xbf16, #tpu.memory_space<vmem>>, vector<32x32xbf16>
    %cst = arith.constant dense<0.000000e+00> : vector<8x32xf32>
    %7 = tpu.matmul %1, %6, %cst {dimension_numbers = #tpu.dot_dimension_numbers<[1], [0], [0], [1], [0, 0, 1, 1], [], []>} : vector<8x32xbf16>, vector<32x32xbf16>, vector<8x32xf32> -> vector<8x32xf32>
    %c0_10 = arith.constant 0 : index
    %c0_11 = arith.constant 0 : index
    %8 = vector.load %arg5[%c0_10, %c0_11] : memref<32x32xbf16, #tpu.memory_space<vmem>>, vector<32x32xbf16>
    %cst_12 = arith.constant dense<0.000000e+00> : vector<8x32xf32>
    %9 = tpu.matmul %3, %8, %cst_12 {dimension_numbers = #tpu.dot_dimension_numbers<[1], [0], [0], [1], [0, 0, 1, 1], [], []>} : vector<8x32xbf16>, vector<32x32xbf16>, vector<8x32xf32> -> vector<8x32xf32>
    %c0_13 = arith.constant 0 : index
    %c0_14 = arith.constant 0 : index
    %10 = vector.load %arg6[%c0_13, %c0_14] : memref<32x32xbf16, #tpu.memory_space<vmem>>, vector<32x32xbf16>
    %cst_15 = arith.constant dense<0.000000e+00> : vector<8x32xf32>
    %11 = tpu.matmul %5, %10, %cst_15 {dimension_numbers = #tpu.dot_dimension_numbers<[1], [0], [0], [1], [0, 0, 1, 1], [], []>} : vector<8x32xbf16>, vector<32x32xbf16>, vector<8x32xf32> -> vector<8x32xf32>
    %12 = arith.truncf %7 : vector<8x32xf32> to vector<8x32xbf16>
    %13 = arith.truncf %9 : vector<8x32xf32> to vector<8x32xbf16>
    %14 = arith.truncf %11 : vector<8x32xf32> to vector<8x32xbf16>
    %15 = vector.extract_strided_slice %12 {offsets = [0, 0], sizes = [8, 8], strides = [1, 1]} : vector<8x32xbf16> to vector<8x8xbf16>
    %16 = vector.extract_strided_slice %13 {offsets = [0, 0], sizes = [8, 8], strides = [1, 1]} : vector<8x32xbf16> to vector<8x8xbf16>
    %17 = vector.extract_strided_slice %14 {offsets = [0, 0], sizes = [8, 8], strides = [1, 1]} : vector<8x32xbf16> to vector<8x8xbf16>
    %cst_16 = arith.constant dense<0.000000e+00> : vector<8x8xf32>
    %18 = tpu.matmul %15, %16, %cst_16 {dimension_numbers = #tpu.dot_dimension_numbers<[1], [1], [0], [0], [0, 0, 1, 0], [], []>} : vector<8x8xbf16>, vector<8x8xbf16>, vector<8x8xf32> -> vector<8x8xf32>
    %cst_17 = arith.constant 0.353553385 : f32
    %19 = vector.broadcast %cst_17 : f32 to vector<8x8xf32>
    %20 = arith.mulf %18, %19 : vector<8x8xf32>
    %cst_18 = arith.constant dense<0xFF800000> : vector<8xf32>
    %21 = vector.multi_reduction <maximumf>, %20, %cst_18 [1] : vector<8x8xf32> to vector<8xf32>
    %22 = vector.shape_cast %21 : vector<8xf32> to vector<8x1xf32>
    %23 = vector.broadcast %22 : vector<8x1xf32> to vector<8x8xf32>
    %24 = arith.subf %20, %23 : vector<8x8xf32>
    %25 = math.exp %24 : vector<8x8xf32>
    %cst_19 = arith.constant dense<0.000000e+00> : vector<8xf32>
    %26 = vector.multi_reduction <add>, %25, %cst_19 [1] : vector<8x8xf32> to vector<8xf32>
    %27 = vector.shape_cast %26 : vector<8xf32> to vector<8x1xf32>
    %28 = tpu.reciprocal %27 {approx = true} : vector<8x1xf32> -> vector<8x1xf32>
    %29 = vector.broadcast %28 : vector<8x1xf32> to vector<8x8xf32>
    %30 = arith.mulf %25, %29 : vector<8x8xf32>
    %c0_20 = arith.constant 0 : index
    %c0_21 = arith.constant 0 : index
    %c0_22 = arith.constant 0 : index
    %c0_23 = arith.constant 0 : index
    %31 = vector.load %arg9[%c0_20, %c0_21, %c0_22, %c0_23] : memref<4x1x8x8xf32, #tpu.memory_space<vmem>>, vector<1x1x8x8xf32>
    %32 = vector.shape_cast %31 : vector<1x1x8x8xf32> to vector<8x8xf32>
    %33 = vector.shape_cast %30 : vector<8x8xf32> to vector<1x1x8x8xf32>
    tpu.vector_store %arg9[%c0_20, %c0_21, %c0_22, %c0_23], %33 {strides = array<i32>} : memref<4x1x8x8xf32, #tpu.memory_space<vmem>>, vector<1x1x8x8xf32>,
    %34 = arith.truncf %30 : vector<8x8xf32> to vector<8x8xbf16>
    %cst_24 = arith.constant dense<0.000000e+00> : vector<8x8xf32>
    %35 = tpu.matmul %34, %17, %cst_24 {dimension_numbers = #tpu.dot_dimension_numbers<[1], [0], [0], [1], [0, 0, 1, 1], [], []>} : vector<8x8xbf16>, vector<8x8xbf16>, vector<8x8xf32> -> vector<8x8xf32>
    %36 = vector.extract_strided_slice %12 {offsets = [0, 8], sizes = [8, 8], strides = [1, 1]} : vector<8x32xbf16> to vector<8x8xbf16>
    %37 = vector.extract_strided_slice %13 {offsets = [0, 8], sizes = [8, 8], strides = [1, 1]} : vector<8x32xbf16> to vector<8x8xbf16>
    %38 = vector.extract_strided_slice %14 {offsets = [0, 8], sizes = [8, 8], strides = [1, 1]} : vector<8x32xbf16> to vector<8x8xbf16>
    %cst_25 = arith.constant dense<0.000000e+00> : vector<8x8xf32>
    %39 = tpu.matmul %36, %37, %cst_25 {dimension_numbers = #tpu.dot_dimension_numbers<[1], [1], [0], [0], [0, 0, 1, 0], [], []>} : vector<8x8xbf16>, vector<8x8xbf16>, vector<8x8xf32> -> vector<8x8xf32>
    %cst_26 = arith.constant 0.353553385 : f32
    %40 = vector.broadcast %cst_26 : f32 to vector<8x8xf32>
    %41 = arith.mulf %39, %40 : vector<8x8xf32>
    %cst_27 = arith.constant dense<0xFF800000> : vector<8xf32>
    %42 = vector.multi_reduction <maximumf>, %41, %cst_27 [1] : vector<8x8xf32> to vector<8xf32>
    %43 = vector.shape_cast %42 : vector<8xf32> to vector<8x1xf32>
    %44 = vector.broadcast %43 : vector<8x1xf32> to vector<8x8xf32>
    %45 = arith.subf %41, %44 : vector<8x8xf32>
    %46 = math.exp %45 : vector<8x8xf32>
    %cst_28 = arith.constant dense<0.000000e+00> : vector<8xf32>
    %47 = vector.multi_reduction <add>, %46, %cst_28 [1] : vector<8x8xf32> to vector<8xf32>
    %48 = vector.shape_cast %47 : vector<8xf32> to vector<8x1xf32>
    %49 = tpu.reciprocal %48 {approx = true} : vector<8x1xf32> -> vector<8x1xf32>
    %50 = vector.broadcast %49 : vector<8x1xf32> to vector<8x8xf32>
    %51 = arith.mulf %46, %50 : vector<8x8xf32>
    %c1 = arith.constant 1 : index
    %c0_29 = arith.constant 0 : index
    %c0_30 = arith.constant 0 : index
    %c0_31 = arith.constant 0 : index
    %52 = vector.load %arg9[%c1, %c0_29, %c0_30, %c0_31] : memref<4x1x8x8xf32, #tpu.memory_space<vmem>>, vector<1x1x8x8xf32>
    %53 = vector.shape_cast %52 : vector<1x1x8x8xf32> to vector<8x8xf32>
    %54 = vector.shape_cast %51 : vector<8x8xf32> to vector<1x1x8x8xf32>
    tpu.vector_store %arg9[%c1, %c0_29, %c0_30, %c0_31], %54 {strides = array<i32>} : memref<4x1x8x8xf32, #tpu.memory_space<vmem>>, vector<1x1x8x8xf32>,
    %55 = arith.truncf %51 : vector<8x8xf32> to vector<8x8xbf16>
    %cst_32 = arith.constant dense<0.000000e+00> : vector<8x8xf32>
    %56 = tpu.matmul %55, %38, %cst_32 {dimension_numbers = #tpu.dot_dimension_numbers<[1], [0], [0], [1], [0, 0, 1, 1], [], []>} : vector<8x8xbf16>, vector<8x8xbf16>, vector<8x8xf32> -> vector<8x8xf32>
    %57 = vector.extract_strided_slice %12 {offsets = [0, 16], sizes = [8, 8], strides = [1, 1]} : vector<8x32xbf16> to vector<8x8xbf16>
    %58 = vector.extract_strided_slice %13 {offsets = [0, 16], sizes = [8, 8], strides = [1, 1]} : vector<8x32xbf16> to vector<8x8xbf16>
    %59 = vector.extract_strided_slice %14 {offsets = [0, 16], sizes = [8, 8], strides = [1, 1]} : vector<8x32xbf16> to vector<8x8xbf16>
    %cst_33 = arith.constant dense<0.000000e+00> : vector<8x8xf32>
    %60 = tpu.matmul %57, %58, %cst_33 {dimension_numbers = #tpu.dot_dimension_numbers<[1], [1], [0], [0], [0, 0, 1, 0], [], []>} : vector<8x8xbf16>, vector<8x8xbf16>, vector<8x8xf32> -> vector<8x8xf32>
    %cst_34 = arith.constant 0.353553385 : f32
    %61 = vector.broadcast %cst_34 : f32 to vector<8x8xf32>
    %62 = arith.mulf %60, %61 : vector<8x8xf32>
    %cst_35 = arith.constant dense<0xFF800000> : vector<8xf32>
    %63 = vector.multi_reduction <maximumf>, %62, %cst_35 [1] : vector<8x8xf32> to vector<8xf32>
    %64 = vector.shape_cast %63 : vector<8xf32> to vector<8x1xf32>
    %65 = vector.broadcast %64 : vector<8x1xf32> to vector<8x8xf32>
    %66 = arith.subf %62, %65 : vector<8x8xf32>
    %67 = math.exp %66 : vector<8x8xf32>
    %cst_36 = arith.constant dense<0.000000e+00> : vector<8xf32>
    %68 = vector.multi_reduction <add>, %67, %cst_36 [1] : vector<8x8xf32> to vector<8xf32>
    %69 = vector.shape_cast %68 : vector<8xf32> to vector<8x1xf32>
    %70 = tpu.reciprocal %69 {approx = true} : vector<8x1xf32> -> vector<8x1xf32>
    %71 = vector.broadcast %70 : vector<8x1xf32> to vector<8x8xf32>
    %72 = arith.mulf %67, %71 : vector<8x8xf32>
    %c2 = arith.constant 2 : index
    %c0_37 = arith.constant 0 : index
    %c0_38 = arith.constant 0 : index
    %c0_39 = arith.constant 0 : index
    %73 = vector.load %arg9[%c2, %c0_37, %c0_38, %c0_39] : memref<4x1x8x8xf32, #tpu.memory_space<vmem>>, vector<1x1x8x8xf32>
    %74 = vector.shape_cast %73 : vector<1x1x8x8xf32> to vector<8x8xf32>
    %75 = vector.shape_cast %72 : vector<8x8xf32> to vector<1x1x8x8xf32>
    tpu.vector_store %arg9[%c2, %c0_37, %c0_38, %c0_39], %75 {strides = array<i32>} : memref<4x1x8x8xf32, #tpu.memory_space<vmem>>, vector<1x1x8x8xf32>,
    %76 = arith.truncf %72 : vector<8x8xf32> to vector<8x8xbf16>
    %cst_40 = arith.constant dense<0.000000e+00> : vector<8x8xf32>
    %77 = tpu.matmul %76, %59, %cst_40 {dimension_numbers = #tpu.dot_dimension_numbers<[1], [0], [0], [1], [0, 0, 1, 1], [], []>} : vector<8x8xbf16>, vector<8x8xbf16>, vector<8x8xf32> -> vector<8x8xf32>
    %78 = vector.extract_strided_slice %12 {offsets = [0, 24], sizes = [8, 8], strides = [1, 1]} : vector<8x32xbf16> to vector<8x8xbf16>
    %79 = vector.extract_strided_slice %13 {offsets = [0, 24], sizes = [8, 8], strides = [1, 1]} : vector<8x32xbf16> to vector<8x8xbf16>
    %80 = vector.extract_strided_slice %14 {offsets = [0, 24], sizes = [8, 8], strides = [1, 1]} : vector<8x32xbf16> to vector<8x8xbf16>
    %cst_41 = arith.constant dense<0.000000e+00> : vector<8x8xf32>
    %81 = tpu.matmul %78, %79, %cst_41 {dimension_numbers = #tpu.dot_dimension_numbers<[1], [1], [0], [0], [0, 0, 1, 0], [], []>} : vector<8x8xbf16>, vector<8x8xbf16>, vector<8x8xf32> -> vector<8x8xf32>
    %cst_42 = arith.constant 0.353553385 : f32
    %82 = vector.broadcast %cst_42 : f32 to vector<8x8xf32>
    %83 = arith.mulf %81, %82 : vector<8x8xf32>
    %cst_43 = arith.constant dense<0xFF800000> : vector<8xf32>
    %84 = vector.multi_reduction <maximumf>, %83, %cst_43 [1] : vector<8x8xf32> to vector<8xf32>
    %85 = vector.shape_cast %84 : vector<8xf32> to vector<8x1xf32>
    %86 = vector.broadcast %85 : vector<8x1xf32> to vector<8x8xf32>
    %87 = arith.subf %83, %86 : vector<8x8xf32>
    %88 = math.exp %87 : vector<8x8xf32>
    %cst_44 = arith.constant dense<0.000000e+00> : vector<8xf32>
    %89 = vector.multi_reduction <add>, %88, %cst_44 [1] : vector<8x8xf32> to vector<8xf32>
    %90 = vector.shape_cast %89 : vector<8xf32> to vector<8x1xf32>
    %91 = tpu.reciprocal %90 {approx = true} : vector<8x1xf32> -> vector<8x1xf32>
    %92 = vector.broadcast %91 : vector<8x1xf32> to vector<8x8xf32>
    %93 = arith.mulf %88, %92 : vector<8x8xf32>
    %c3 = arith.constant 3 : index
    %c0_45 = arith.constant 0 : index
    %c0_46 = arith.constant 0 : index
    %c0_47 = arith.constant 0 : index
    %94 = vector.load %arg9[%c3, %c0_45, %c0_46, %c0_47] : memref<4x1x8x8xf32, #tpu.memory_space<vmem>>, vector<1x1x8x8xf32>
    %95 = vector.shape_cast %94 : vector<1x1x8x8xf32> to vector<8x8xf32>
    %96 = vector.shape_cast %93 : vector<8x8xf32> to vector<1x1x8x8xf32>
    tpu.vector_store %arg9[%c3, %c0_45, %c0_46, %c0_47], %96 {strides = array<i32>} : memref<4x1x8x8xf32, #tpu.memory_space<vmem>>, vector<1x1x8x8xf32>,
    %97 = arith.truncf %93 : vector<8x8xf32> to vector<8x8xbf16>
    %cst_48 = arith.constant dense<0.000000e+00> : vector<8x8xf32>
    %98 = tpu.matmul %97, %80, %cst_48 {dimension_numbers = #tpu.dot_dimension_numbers<[1], [0], [0], [1], [0, 0, 1, 1], [], []>} : vector<8x8xbf16>, vector<8x8xbf16>, vector<8x8xf32> -> vector<8x8xf32>
    %99 = tpu.concatenate %35, %56, %77, %98 in 1 : vector<8x8xf32>, vector<8x8xf32>, vector<8x8xf32>, vector<8x8xf32> -> vector<8x32xf32>
    %100 = arith.truncf %99 : vector<8x32xf32> to vector<8x32xbf16>
    %c0_49 = arith.constant 0 : index
    %c0_50 = arith.constant 0 : index
    %101 = vector.load %arg7[%c0_49, %c0_50] : memref<32x32xbf16, #tpu.memory_space<vmem>>, vector<32x32xbf16>
    %cst_51 = arith.constant dense<0.000000e+00> : vector<8x32xf32>
    %102 = tpu.matmul %100, %101, %cst_51 {dimension_numbers = #tpu.dot_dimension_numbers<[1], [0], [0], [1], [0, 0, 1, 1], [], []>} : vector<8x32xbf16>, vector<32x32xbf16>, vector<8x32xf32> -> vector<8x32xf32>
    %c0_52 = arith.constant 0 : index
    %c0_53 = arith.constant 0 : index
    %c0_54 = arith.constant 0 : index
    %103 = vector.load %arg8[%c0_52, %c0_53, %c0_54] : memref<1x8x32xf32, #tpu.memory_space<vmem>>, vector<1x8x32xf32>
    %104 = vector.shape_cast %103 : vector<1x8x32xf32> to vector<8x32xf32>
    %105 = vector.shape_cast %102 : vector<8x32xf32> to vector<1x8x32xf32>
    tpu.vector_store %arg8[%c0_52, %c0_53, %c0_54], %105 {strides = array<i32>} : memref<1x8x32xf32, #tpu.memory_space<vmem>>, vector<1x8x32xf32>,
    return
  }
  func.func @transform_0(%arg0: i32) -> (i32, i32, i32) {
    %c0_i32 = arith.constant 0 : i32
    %c0_i32_0 = arith.constant 0 : i32
    %c0_i32_1 = arith.constant 0 : i32
    return %arg0, %c0_i32, %c0_i32_0 : i32, i32, i32
  }
  func.func @transform_1(%arg0: i32) -> (i32, i32, i32) {
    %c0_i32 = arith.constant 0 : i32
    %c0_i32_0 = arith.constant 0 : i32
    %c0_i32_1 = arith.constant 0 : i32
    return %arg0, %c0_i32, %c0_i32_0 : i32, i32, i32
  }
  func.func @transform_2(%arg0: i32) -> (i32, i32, i32) {
    %c0_i32 = arith.constant 0 : i32
    %c0_i32_0 = arith.constant 0 : i32
    %c0_i32_1 = arith.constant 0 : i32
    return %arg0, %c0_i32, %c0_i32_0 : i32, i32, i32
  }
  func.func @transform_3(%arg0: i32) -> (i32, i32) {
    %c0_i32 = arith.constant 0 : i32
    %c0_i32_0 = arith.constant 0 : i32
    %c0_i32_1 = arith.constant 0 : i32
    return %c0_i32, %c0_i32_0 : i32, i32
  }
  func.func @transform_4(%arg0: i32) -> (i32, i32) {
    %c0_i32 = arith.constant 0 : i32
    %c0_i32_0 = arith.constant 0 : i32
    %c0_i32_1 = arith.constant 0 : i32
    return %c0_i32, %c0_i32_0 : i32, i32
  }
  func.func @transform_5(%arg0: i32) -> (i32, i32) {
    %c0_i32 = arith.constant 0 : i32
    %c0_i32_0 = arith.constant 0 : i32
    %c0_i32_1 = arith.constant 0 : i32
    return %c0_i32, %c0_i32_0 : i32, i32
  }
  func.func @transform_6(%arg0: i32) -> (i32, i32) {
    %c0_i32 = arith.constant 0 : i32
    %c0_i32_0 = arith.constant 0 : i32
    %c0_i32_1 = arith.constant 0 : i32
    return %c0_i32, %c0_i32_0 : i32, i32
  }
  func.func @transform_7(%arg0: i32) -> (i32, i32, i32) {
    %c0_i32 = arith.constant 0 : i32
    %c0_i32_0 = arith.constant 0 : i32
    %c0_i32_1 = arith.constant 0 : i32
    return %arg0, %c0_i32, %c0_i32_0 : i32, i32, i32
  }
  func.func @transform_8(%arg0: i32) -> (i32, i32, i32, i32) {
    %c0_i32 = arith.constant 0 : i32
    %c0_i32_0 = arith.constant 0 : i32
    %c0_i32_1 = arith.constant 0 : i32
    %c0_i32_2 = arith.constant 0 : i32
    return %c0_i32, %arg0, %c0_i32_0, %c0_i32_1 : i32, i32, i32, i32
  }
}

</mosaic_0001>

<llo_original>
// kernel: tpu_custom_call.1
$region0: #{tpu_custom_call.1}
  #allocation0 [shape = 'u32[]', space=smem, size = 0x4, offset = 0x4, fixed_abs, tag = 'smem constant byte address 0x4 - core index']
  #allocation1 [shape = 'u32[144,128]{1,0:T(1,128)}', space=vmem, size = 0x12000, scoped, tag = 'internal scratch']
  %s0 = inlined_call_operand.hbm [shape: bf16[2,8,32], index: 0, kind: input, shape index: {}]
  %s1 = inlined_call_operand.hbm [shape: bf16[2,8,32], index: 1, kind: input, shape index: {}]
  %s2 = inlined_call_operand.hbm [shape: bf16[2,8,32], index: 2, kind: input, shape index: {}]
  %s3 = inlined_call_operand.hbm [shape: bf16[32,32], index: 3, kind: input, shape index: {}]
  %s4 = inlined_call_operand.hbm [shape: bf16[32,32], index: 4, kind: input, shape index: {}]
  %s5 = inlined_call_operand.hbm [shape: bf16[32,32], index: 5, kind: input, shape index: {}]
  %s6 = inlined_call_operand.hbm [shape: bf16[32,32], index: 6, kind: input, shape index: {}]
  %s7 = inlined_call_operand.hbm [shape: f32[2,8,32], index: 7, kind: output, shape index: {0}]
  %s8 = inlined_call_operand.hbm [shape: f32[4,2,8,8], index: 8, kind: output, shape index: {1}]
  %9 = xla_tuple %s7, %s8
  %s10 = sld [smem:[#allocation0]]
  $region97: #{tpu_custom_call.1} parent=0
    _
  %s12 = ssub.s32 1, %s10
  %s13 = scalar_select 0, %s12, %s10
  $region1: #{tpu_custom_call.1} parent=0
    #allocation2 [shape = 'u8[4096]{0}', space=vmem, size = 0x1000, scoped, tag = 'input window, operand 0']
    #allocation3 [shape = 's32[2]{0}', space=sflag, size = 0x8, scoped, tag = 'scoped memory for tpu_custom_call.1']
    #allocation4 [shape = 's32[2]{0}', space=sflag, size = 0x8, scoped, tag = 'scoped memory for tpu_custom_call.1']
    #allocation5 [shape = 'u8[4096]{0}', space=vmem, size = 0x1000, scoped, tag = 'input window, operand 1']
    #allocation6 [shape = 's32[2]{0}', space=sflag, size = 0x8, scoped, tag = 'scoped memory for tpu_custom_call.1']
    #allocation7 [shape = 'u8[4096]{0}', space=vmem, size = 0x1000, scoped, tag = 'input window, operand 2']
    #allocation8 [shape = 'u8[8192]{0}', space=vmem, size = 0x2000, scoped, tag = 'input window, operand 3, single buffered']
    #allocation9 [shape = 's32[1]{0}', space=sflag, size = 0x4, scoped, tag = 'scoped memory for tpu_custom_call.1']
    #allocation10 [shape = 'u8[8192]{0}', space=vmem, size = 0x2000, scoped, tag = 'input window, operand 4, single buffered']
    #allocation11 [shape = 'u8[8192]{0}', space=vmem, size = 0x2000, scoped, tag = 'input window, operand 5, single buffered']
    #allocation12 [shape = 's32[1]{0}', space=sflag, size = 0x4, scoped, tag = 'scoped memory for tpu_custom_call.1']
    #allocation13 [shape = 'u8[8192]{0}', space=vmem, size = 0x2000, scoped, tag = 'input window, operand 6, single buffered']
    #allocation14 [shape = 'u8[8192]{0}', space=vmem, size = 0x2000, scoped, tag = 'output window, operand 0']
    #allocation15 [shape = 'u8[32768]{0}', space=vmem, size = 0x8000, scoped, tag = 'output window, operand 1']
    #allocation16 [shape = 's32[2]{0}', space=sflag, size = 0x8, scoped, tag = 'scoped memory for tpu_custom_call.1']
    %14 = vsyncpa [#allocation3], 0
    %s15 = scalar_lea.sflag [#allocation3], 1
    %16 = vsyncpa %s15, 0
    %17 = vsyncpa [#allocation6], 0
    %s18 = scalar_lea.sflag [#allocation6], 1
    %19 = vsyncpa %s18, 0
    %20 = vsyncpa [#allocation9], 0
    %21 = vsyncpa [#allocation12], 0
    %22 = vsyncpa [#allocation4], 0
    %s23 = scalar_lea.sflag [#allocation4], 1
    %24 = vsyncpa %s23, 0
    %25 = vsyncpa [#allocation16], 0
    %s26 = scalar_lea.sflag [#allocation16], 1
    %27 = vsyncpa %s26, 0
    loop: start=0, step=1, limit=4
    $region2: #{tpu_custom_call.1} parent=1 // loop_pre_header
      _
    $region3: #{tpu_custom_call.1} parent=1 // loop_header
      %s29 = sphi 0, %s33
      %p30 = scmp.ge.s32.totalorder %s29, 4
      %s39 = sphi 0, %s41
      %s42 = sphi 0, %s39
      %s43 = sphi 0, %s42
      %s59 = sphi 0, %s43
      %s65 = sphi 0, %s67
      %s68 = sphi 0, %s65
      %s69 = sphi 0, %s68
      %s85 = sphi 0, %s69
      %s91 = sphi 0, %s93
      %s94 = sphi 0, %s91
      %s95 = sphi 0, %s94
      %s111 = sphi 0, %s95
      %s115 = sphi 0, %s115
      %s117 = sphi 0, %s115
      %s118 = sphi 0, %s117
      %s132 = sphi 0, %s118
      %s136 = sphi 0, %s136
      %s138 = sphi 0, %s136
      %s139 = sphi 0, %s138
      %s153 = sphi 0, %s139
      %s157 = sphi 0, %s157
      %s159 = sphi 0, %s157
      %s160 = sphi 0, %s159
      %s174 = sphi 0, %s160
      %s178 = sphi 0, %s178
      %s180 = sphi 0, %s178
      %s181 = sphi 0, %s180
      %s195 = sphi 0, %s181
      %s201 = sphi 0, %s203
      %s204 = sphi 0, %s201
      %s205 = sphi 0, %s204
      %s221 = sphi 0, %s205
      %s227 = sphi 0, %s229
      %s230 = sphi 0, %s227
      %s231 = sphi 0, %s230
      %s247 = sphi 0, %s231
    $region4: #{tpu_custom_call.1} parent=1 // loop_header_branch
      %32 = sbr.rel (%p30) target = $region8
    $region5: #{tpu_custom_call.1} parent=1 // loop_body
      %s34 = ssub.s32 %s29, 1
      %s35 = ssub.s32 %s29, 2
      %s36 = sadd.s32 %s29, 1
      %s37 = ssub.s32 %s29, %s36
      %p38 = scmp.eq.s32.totalorder %s37, 0
      %s40 = sadd.s32 %s39, 1
      %s41 = scalar_select %p38, %s39, %s40
      %p44 = pneg %p38
      %p45 = scmp.eq.s32.totalorder %s29, 1
      %p46 = por %p44, %p45
      %p47 = scmp.ne.s32.totalorder %s39, %s42
      %p48 = scmp.eq.s32.totalorder %s29, 0
      %p49 = por %p47, %p48
      %p50 = scmp.ne.s32.totalorder %s39, %s42
      %p51 = scmp.eq.s32.totalorder %s34, 1
      %p52 = por %p50, %p51
      %p53 = scmp.ne.s32.totalorder %s42, %s43
      %p54 = scmp.eq.s32.totalorder %s34, 0
      %p55 = por %p53, %p54
      %p56 = scmp.ne.s32.totalorder %s42, %s43
      %p57 = scmp.eq.s32.totalorder %s35, 1
      %p58 = por %p56, %p57
      %p60 = scmp.ne.s32.totalorder %s43, %s59
      %p61 = scmp.eq.s32.totalorder %s35, 0
      %p62 = por %p60, %p61
      %s63 = ssub.s32 %s29, %s36
      %p64 = scmp.eq.s32.totalorder %s63, 0
      %s66 = sadd.s32 %s65, 1
      %s67 = scalar_select %p64, %s65, %s66
      %p70 = pneg %p64
      %p71 = scmp.eq.s32.totalorder %s29, 1
      %p72 = por %p70, %p71
      %p73 = scmp.ne.s32.totalorder %s65, %s68
      %p74 = scmp.eq.s32.totalorder %s29, 0
      %p75 = por %p73, %p74
      %p76 = scmp.ne.s32.totalorder %s65, %s68
      %p77 = scmp.eq.s32.totalorder %s34, 1
      %p78 = por %p76, %p77
      %p79 = scmp.ne.s32.totalorder %s68, %s69
      %p80 = scmp.eq.s32.totalorder %s34, 0
      %p81 = por %p79, %p80
      %p82 = scmp.ne.s32.totalorder %s68, %s69
      %p83 = scmp.eq.s32.totalorder %s35, 1
      %p84 = por %p82, %p83
      %p86 = scmp.ne.s32.totalorder %s69, %s85
      %p87 = scmp.eq.s32.totalorder %s35, 0
      %p88 = por %p86, %p87
      %s89 = ssub.s32 %s29, %s36
      %p90 = scmp.eq.s32.totalorder %s89, 0
      %s92 = sadd.s32 %s91, 1
      %s93 = scalar_select %p90, %s91, %s92
      %p96 = pneg %p90
      %p97 = scmp.eq.s32.totalorder %s29, 1
      %p98 = por %p96, %p97
      %p99 = scmp.ne.s32.totalorder %s91, %s94
      %p100 = scmp.eq.s32.totalorder %s29, 0
      %p101 = por %p99, %p100
      %p102 = scmp.ne.s32.totalorder %s91, %s94
      %p103 = scmp.eq.s32.totalorder %s34, 1
      %p104 = por %p102, %p103
      %p105 = scmp.ne.s32.totalorder %s94, %s95
      %p106 = scmp.eq.s32.totalorder %s34, 0
      %p107 = por %p105, %p106
      %p108 = scmp.ne.s32.totalorder %s94, %s95
      %p109 = scmp.eq.s32.totalorder %s35, 1
      %p110 = por %p108, %p109
      %p112 = scmp.ne.s32.totalorder %s95, %s111
      %p113 = scmp.eq.s32.totalorder %s35, 0
      %p114 = por %p112, %p113
      %s116 = sadd.s32 %s115, 1
      %p119 = scmp.eq.s32.totalorder %s29, 1
      %p120 = scmp.ne.s32.totalorder %s115, %s117
      %p121 = scmp.eq.s32.totalorder %s29, 0
      %p122 = por %p120, %p121
      %p123 = scmp.ne.s32.totalorder %s115, %s117
      %p124 = scmp.eq.s32.totalorder %s34, 1
      %p125 = por %p123, %p124
      %p126 = scmp.ne.s32.totalorder %s117, %s118
      %p127 = scmp.eq.s32.totalorder %s34, 0
      %p128 = por %p126, %p127
      %p129 = scmp.ne.s32.totalorder %s117, %s118
      %p130 = scmp.eq.s32.totalorder %s35, 1
      %p131 = por %p129, %p130
      %p133 = scmp.ne.s32.totalorder %s118, %s132
      %p134 = scmp.eq.s32.totalorder %s35, 0
      %p135 = por %p133, %p134
      %s137 = sadd.s32 %s136, 1
      %p140 = scmp.eq.s32.totalorder %s29, 1
      %p141 = scmp.ne.s32.totalorder %s136, %s138
      %p142 = scmp.eq.s32.totalorder %s29, 0
      %p143 = por %p141, %p142
      %p144 = scmp.ne.s32.totalorder %s136, %s138
      %p145 = scmp.eq.s32.totalorder %s34, 1
      %p146 = por %p144, %p145
      %p147 = scmp.ne.s32.totalorder %s138, %s139
      %p148 = scmp.eq.s32.totalorder %s34, 0
      %p149 = por %p147, %p148
      %p150 = scmp.ne.s32.totalorder %s138, %s139
      %p151 = scmp.eq.s32.totalorder %s35, 1
      %p152 = por %p150, %p151
      %p154 = scmp.ne.s32.totalorder %s139, %s153
      %p155 = scmp.eq.s32.totalorder %s35, 0
      %p156 = por %p154, %p155
      %s158 = sadd.s32 %s157, 1
      %p161 = scmp.eq.s32.totalorder %s29, 1
      %p162 = scmp.ne.s32.totalorder %s157, %s159
      %p163 = scmp.eq.s32.totalorder %s29, 0
      %p164 = por %p162, %p163
      %p165 = scmp.ne.s32.totalorder %s157, %s159
      %p166 = scmp.eq.s32.totalorder %s34, 1
      %p167 = por %p165, %p166
      %p168 = scmp.ne.s32.totalorder %s159, %s160
      %p169 = scmp.eq.s32.totalorder %s34, 0
      %p170 = por %p168, %p169
      %p171 = scmp.ne.s32.totalorder %s159, %s160
      %p172 = scmp.eq.s32.totalorder %s35, 1
      %p173 = por %p171, %p172
      %p175 = scmp.ne.s32.totalorder %s160, %s174
      %p176 = scmp.eq.s32.totalorder %s35, 0
      %p177 = por %p175, %p176
      %s179 = sadd.s32 %s178, 1
      %p182 = scmp.eq.s32.totalorder %s29, 1
      %p183 = scmp.ne.s32.totalorder %s178, %s180
      %p184 = scmp.eq.s32.totalorder %s29, 0
      %p185 = por %p183, %p184
      %p186 = scmp.ne.s32.totalorder %s178, %s180
      %p187 = scmp.eq.s32.totalorder %s34, 1
      %p188 = por %p186, %p187
      %p189 = scmp.ne.s32.totalorder %s180, %s181
      %p190 = scmp.eq.s32.totalorder %s34, 0
      %p191 = por %p189, %p190
      %p192 = scmp.ne.s32.totalorder %s180, %s181
      %p193 = scmp.eq.s32.totalorder %s35, 1
      %p194 = por %p192, %p193
      %p196 = scmp.ne.s32.totalorder %s181, %s195
      %p197 = scmp.eq.s32.totalorder %s35, 0
      %p198 = por %p196, %p197
      %s199 = ssub.s32 %s29, %s36
      %p200 = scmp.eq.s32.totalorder %s199, 0
      %s202 = sadd.s32 %s201, 1
      %s203 = scalar_select %p200, %s201, %s202
      %p206 = pneg %p200
      %p207 = scmp.eq.s32.totalorder %s29, 1
      %p208 = por %p206, %p207
      %p209 = scmp.ne.s32.totalorder %s201, %s204
      %p210 = scmp.eq.s32.totalorder %s29, 0
      %p211 = por %p209, %p210
      %p212 = scmp.ne.s32.totalorder %s201, %s204
      %p213 = scmp.eq.s32.totalorder %s34, 1
      %p214 = por %p212, %p213
      %p215 = scmp.ne.s32.totalorder %s204, %s205
      %p216 = scmp.eq.s32.totalorder %s34, 0
      %p217 = por %p215, %p216
      %p218 = scmp.ne.s32.totalorder %s204, %s205
      %p219 = scmp.eq.s32.totalorder %s35, 1
      %p220 = por %p218, %p219
      %p222 = scmp.ne.s32.totalorder %s205, %s221
      %p223 = scmp.eq.s32.totalorder %s35, 0
      %p224 = por %p222, %p223
      %s225 = ssub.s32 %s29, %s36
      %p226 = scmp.eq.s32.totalorder %s225, 0
      %s228 = sadd.s32 %s227, 1
      %s229 = scalar_select %p226, %s227, %s228
      %p232 = pneg %p226
      %p233 = scmp.eq.s32.totalorder %s29, 1
      %p234 = por %p232, %p233
      %p235 = scmp.ne.s32.totalorder %s227, %s230
      %p236 = scmp.eq.s32.totalorder %s29, 0
      %p237 = por %p235, %p236
      %p238 = scmp.ne.s32.totalorder %s227, %s230
      %p239 = scmp.eq.s32.totalorder %s34, 1
      %p240 = por %p238, %p239
      %p241 = scmp.ne.s32.totalorder %s230, %s231
      %p242 = scmp.eq.s32.totalorder %s34, 0
      %p243 = por %p241, %p242
      %p244 = scmp.ne.s32.totalorder %s230, %s231
      %p245 = scmp.eq.s32.totalorder %s35, 1
      %p246 = por %p244, %p245
      %p248 = scmp.ne.s32.totalorder %s231, %s247
      %p249 = scmp.eq.s32.totalorder %s35, 0
      %p250 = por %p248, %p249
      %p251 = scmp.le.s32.totalorder 1, %s29
      %p252 = scmp.lt.s32.totalorder %s29, 3
      %p253 = pnand %p251, %p252
      %p254 = pneg %p253
      // Predicated region
      $region9: #{tpu_custom_call.1} parent=5 // pred_check
        _
      $region10: #{tpu_custom_call.1} parent=5 // pred_check_branch
        %256 = sbr.rel (%p253) target = $region12
      $region11: #{tpu_custom_call.1} parent=5 // pred_region
        %s257 = ssub.s32 %s29, 1
        // Predicated region
        $region13: #{tpu_custom_call.1} parent=11 // pred_check
          %p258 = pneg %p128
        $region14: #{tpu_custom_call.1} parent=11 // pred_check_branch
          %260 = sbr.rel (%p258) target = $region16
        $region15: #{tpu_custom_call.1} parent=11 // pred_region
          %s262 = ssub.s32 256, 256
          %263 = vsyncadd [#allocation9], %s262
          %s264 = sshll.u32 [#allocation8], 4
          %s265 = int_to_ptr.vmem [resolvable:$true] %s264
          %270 = dma.hbm_to_vmem [thread:$0]  %s3, 256, %s265, [#allocation9], 64, 64, 4
        $region16: #{tpu_custom_call.1} parent=11 // pred_fallthru
          _
        // Predicated region
        $region17: #{tpu_custom_call.1} parent=11 // pred_check
          %p271 = pneg %p149
        $region18: #{tpu_custom_call.1} parent=11 // pred_check_branch
          %273 = sbr.rel (%p271) target = $region20
        $region19: #{tpu_custom_call.1} parent=11 // pred_region
          %s275 = ssub.s32 256, 256
          %276 = vsyncadd [#allocation9], %s275
          %s277 = sshll.u32 [#allocation10], 4
          %s278 = int_to_ptr.vmem [resolvable:$true] %s277
          %283 = dma.hbm_to_vmem [thread:$0]  %s4, 256, %s278, [#allocation9], 64, 64, 4
        $region20: #{tpu_custom_call.1} parent=11 // pred_fallthru
          _
        // Predicated region
        $region21: #{tpu_custom_call.1} parent=11 // pred_check
          %p284 = pneg %p170
        $region22: #{tpu_custom_call.1} parent=11 // pred_check_branch
          %286 = sbr.rel (%p284) target = $region24
        $region23: #{tpu_custom_call.1} parent=11 // pred_region
          %s288 = ssub.s32 256, 256
          %289 = vsyncadd [#allocation12], %s288
          %s290 = sshll.u32 [#allocation11], 4
          %s291 = int_to_ptr.vmem [resolvable:$true] %s290
          %296 = dma.hbm_to_vmem [thread:$0]  %s5, 256, %s291, [#allocation12], 64, 64, 4
        $region24: #{tpu_custom_call.1} parent=11 // pred_fallthru
          _
        // Predicated region
        $region25: #{tpu_custom_call.1} parent=11 // pred_check
          %p297 = pneg %p191
        $region26: #{tpu_custom_call.1} parent=11 // pred_check_branch
          %299 = sbr.rel (%p297) target = $region28
        $region27: #{tpu_custom_call.1} parent=11 // pred_region
          %s301 = ssub.s32 256, 256
          %302 = vsyncadd [#allocation12], %s301
          %s303 = sshll.u32 [#allocation13], 4
          %s304 = int_to_ptr.vmem [resolvable:$true] %s303
          %309 = dma.hbm_to_vmem [thread:$0]  %s6, 256, %s304, [#allocation12], 64, 64, 4
        $region28: #{tpu_custom_call.1} parent=11 // pred_fallthru
          _
      $region12: #{tpu_custom_call.1} parent=5 // pred_fallthru
        _
      %p310 = scmp.lt.s32.totalorder %s29, 2
      // Predicated region
      $region29: #{tpu_custom_call.1} parent=5 // pred_check
        %p311 = pneg %p310
      $region30: #{tpu_custom_call.1} parent=5 // pred_check_branch
        %313 = sbr.rel (%p311) target = $region32
      $region31: #{tpu_custom_call.1} parent=5 // pred_region
        // Predicated region
        $region33: #{tpu_custom_call.1} parent=31 // pred_check
          %p314 = pneg %p49
        $region34: #{tpu_custom_call.1} parent=31 // pred_check_branch
          %316 = sbr.rel (%p314) target = $region36
        $region35: #{tpu_custom_call.1} parent=31 // pred_region
          %s317 = sand.u32 %s39, 1
          %s318 = scalar_lea.sflag [#allocation3], %s317
          %s319 = sand.u32 %s39, 1
          %s320 = smul.addr %s319, 4
          %s321 = scalar_lea.vmem [#allocation2], %s320
          %s323 = ssub.s32 64, 64
          %324 = vsyncadd %s318, %s323
          %s325 = smul.addr %s29, 64
          %s326 = scalar_lea.hbm %s0, %s325
          %s328 = sshll.u32 %s321, 4
          %s329 = int_to_ptr.vmem [resolvable:$true] %s328
          %331 = dma.hbm_to_vmem [thread:$0]  %s326, 64, %s329, %s318
        $region36: #{tpu_custom_call.1} parent=31 // pred_fallthru
          _
        // Predicated region
        $region37: #{tpu_custom_call.1} parent=31 // pred_check
          %p332 = pneg %p75
        $region38: #{tpu_custom_call.1} parent=31 // pred_check_branch
          %334 = sbr.rel (%p332) target = $region40
        $region39: #{tpu_custom_call.1} parent=31 // pred_region
          %s335 = sand.u32 %s29, 1
          %s336 = scalar_lea.sflag [#allocation6], %s335
          %s337 = sand.u32 %s65, 1
          %s338 = smul.addr %s337, 4
          %s339 = scalar_lea.vmem [#allocation5], %s338
          %s341 = ssub.s32 64, 64
          %342 = vsyncadd %s336, %s341
          %s343 = smul.addr %s29, 64
          %s344 = scalar_lea.hbm %s1, %s343
          %s346 = sshll.u32 %s339, 4
          %s347 = int_to_ptr.vmem [resolvable:$true] %s346
          %349 = dma.hbm_to_vmem [thread:$0]  %s344, 64, %s347, %s336
        $region40: #{tpu_custom_call.1} parent=31 // pred_fallthru
          _
        // Predicated region
        $region41: #{tpu_custom_call.1} parent=31 // pred_check
          %p350 = pneg %p101
        $region42: #{tpu_custom_call.1} parent=31 // pred_check_branch
          %352 = sbr.rel (%p350) target = $region44
        $region43: #{tpu_custom_call.1} parent=31 // pred_region
          %s353 = sand.u32 %s29, 1
          %s354 = scalar_lea.sflag [#allocation6], %s353
          %s355 = sand.u32 %s91, 1
          %s356 = smul.addr %s355, 4
          %s357 = scalar_lea.vmem [#allocation7], %s356
          %s359 = ssub.s32 64, 64
          %360 = vsyncadd %s354, %s359
          %s361 = smul.addr %s29, 64
          %s362 = scalar_lea.hbm %s2, %s361
          %s364 = sshll.u32 %s357, 4
          %s365 = int_to_ptr.vmem [resolvable:$true] %s364
          %367 = dma.hbm_to_vmem [thread:$0]  %s362, 64, %s365, %s354
        $region44: #{tpu_custom_call.1} parent=31 // pred_fallthru
          _
      $region32: #{tpu_custom_call.1} parent=5 // pred_fallthru
        _
      %p368 = scmp.le.s32.totalorder 1, %s29
      %p369 = scmp.lt.s32.totalorder %s29, 3
      %p370 = pnand %p368, %p369
      %p371 = pneg %p370
      // Predicated region
      $region45: #{tpu_custom_call.1} parent=5 // pred_check
        _
      $region46: #{tpu_custom_call.1} parent=5 // pred_check_branch
        %373 = sbr.rel (%p370) target = $region48
      $region47: #{tpu_custom_call.1} parent=5 // pred_region
        %s374 = ssub.s32 %s29, 1
        %s375 = sand.u32 %s42, 1
        %s376 = scalar_lea.sflag [#allocation3], %s375
        %s377 = sand.u32 %s42, 1
        %s378 = smul.addr %s377, 4
        %s379 = scalar_lea.vmem [#allocation2], %s378
        // Predicated region
        $region49: #{tpu_custom_call.1} parent=47 // pred_check
          %p380 = pneg %p55
        $region50: #{tpu_custom_call.1} parent=47 // pred_check_branch
          %382 = sbr.rel (%p380) target = $region52
        $region51: #{tpu_custom_call.1} parent=47 // pred_region
          %383 = dma.done %s376, 64
        $region52: #{tpu_custom_call.1} parent=47 // pred_fallthru
          _
        %s384 = sand.u32 %s34, 1
        %s385 = scalar_lea.sflag [#allocation6], %s384
        %s386 = sand.u32 %s68, 1
        %s387 = smul.addr %s386, 4
        %s388 = scalar_lea.vmem [#allocation5], %s387
        // Predicated region
        $region53: #{tpu_custom_call.1} parent=47 // pred_check
          %p389 = pneg %p81
        $region54: #{tpu_custom_call.1} parent=47 // pred_check_branch
          %391 = sbr.rel (%p389) target = $region56
        $region55: #{tpu_custom_call.1} parent=47 // pred_region
          %392 = dma.done %s385, 64
        $region56: #{tpu_custom_call.1} parent=47 // pred_fallthru
          _
        %s393 = sand.u32 %s34, 1
        %s394 = scalar_lea.sflag [#allocation6], %s393
        %s395 = sand.u32 %s94, 1
        %s396 = smul.addr %s395, 4
        %s397 = scalar_lea.vmem [#allocation7], %s396
        // Predicated region
        $region57: #{tpu_custom_call.1} parent=47 // pred_check
          %p398 = pneg %p107
        $region58: #{tpu_custom_call.1} parent=47 // pred_check_branch
          %400 = sbr.rel (%p398) target = $region60
        $region59: #{tpu_custom_call.1} parent=47 // pred_region
          %401 = dma.done %s394, 64
        $region60: #{tpu_custom_call.1} parent=47 // pred_fallthru
          _
        // Predicated region
        $region61: #{tpu_custom_call.1} parent=47 // pred_check
          %p402 = pneg %p128
        $region62: #{tpu_custom_call.1} parent=47 // pred_check_branch
          %404 = sbr.rel (%p402) target = $region64
        $region63: #{tpu_custom_call.1} parent=47 // pred_region
          %405 = dma.done [#allocation9], 256
        $region64: #{tpu_custom_call.1} parent=47 // pred_fallthru
          _
        // Predicated region
        $region65: #{tpu_custom_call.1} parent=47 // pred_check
          %p406 = pneg %p149
        $region66: #{tpu_custom_call.1} parent=47 // pred_check_branch
          %408 = sbr.rel (%p406) target = $region68
        $region67: #{tpu_custom_call.1} parent=47 // pred_region
          %409 = dma.done [#allocation9], 256
        $region68: #{tpu_custom_call.1} parent=47 // pred_fallthru
          _
        // Predicated region
        $region69: #{tpu_custom_call.1} parent=47 // pred_check
          %p410 = pneg %p170
        $region70: #{tpu_custom_call.1} parent=47 // pred_check_branch
          %412 = sbr.rel (%p410) target = $region72
        $region71: #{tpu_custom_call.1} parent=47 // pred_region
          %413 = dma.done [#allocation12], 256
        $region72: #{tpu_custom_call.1} parent=47 // pred_fallthru
          _
        // Predicated region
        $region73: #{tpu_custom_call.1} parent=47 // pred_check
          %p414 = pneg %p191
        $region74: #{tpu_custom_call.1} parent=47 // pred_check_branch
          %416 = sbr.rel (%p414) target = $region76
        $region75: #{tpu_custom_call.1} parent=47 // pred_region
          %417 = dma.done [#allocation12], 256
        $region76: #{tpu_custom_call.1} parent=47 // pred_fallthru
          _
        %s418 = sand.u32 %s42, 1
        %s419 = scalar_lea.sflag [#allocation3], %s418
        %s420 = sand.u32 %s42, 1
        %s421 = smul.addr %s420, 4
        %s422 = scalar_lea.vmem [#allocation2], %s421
        %p423 = pneg %p55
        %p424 = pneg %p52
        %s425 = sand.u32 %s34, 1
        %s426 = scalar_lea.sflag [#allocation6], %s425
        %s427 = sand.u32 %s68, 1
        %s428 = smul.addr %s427, 4
        %s429 = scalar_lea.vmem [#allocation5], %s428
        %p430 = pneg %p81
        %p431 = pneg %p78
        %s432 = sand.u32 %s34, 1
        %s433 = scalar_lea.sflag [#allocation6], %s432
        %s434 = sand.u32 %s94, 1
        %s435 = smul.addr %s434, 4
        %s436 = scalar_lea.vmem [#allocation7], %s435
        %p437 = pneg %p107
        %p438 = pneg %p104
        %p439 = pneg %p128
        %p440 = pneg %p125
        %p441 = pneg %p149
        %p442 = pneg %p146
        %p443 = pneg %p170
        %p444 = pneg %p167
        %p445 = pneg %p191
        %p446 = pneg %p188
        %p447 = pneg %p217
        %p448 = pneg %p214
        %s449 = sand.u32 %s204, 1
        %s450 = scalar_lea.sflag [#allocation4], %s449
        %s451 = sand.u32 %s204, 1
        %s452 = smul.addr %s451, 8
        %s453 = scalar_lea.vmem [#allocation14], %s452
        %p454 = pneg %p243
        %p455 = pneg %p240
        %s456 = sand.u32 %s230, 1
        %s457 = scalar_lea.sflag [#allocation16], %s456
        %s458 = sand.u32 %s230, 1
        %s459 = smul.addr %s458, 32
        %s460 = scalar_lea.vmem [#allocation15], %s459
        %v462 = vld [vmem:[%s379] sm:$0xf]
        %v463 = vld [vmem:[%s388] sm:$0xf]
        %v464 = vld [vmem:[%s397] sm:$0xf]
        %v465 = vld [vmem:[#allocation8] sm:$0xf]
        %v466 = vld [vmem:[#allocation8 + $0x4] sm:$0xf]
        %v467 = vld [vmem:[#allocation8 + $0x8] sm:$0xf]
        %v468 = vld [vmem:[#allocation8 + $0xc] sm:$0xf]
        %v473 = vunpack.c.l.b16 %v465
        %v474 = vunpack.c.l.b16 %v466
        %v475 = vunpack.c.l.b16 %v467
        %v476 = vunpack.c.l.b16 %v468
        %v477 = vpack.c.b16 %v474, %v473
        %v478 = vpack.c.b16 %v476, %v475
        %vm481 = vcmask 261120
        %v483 = vsel %vm481, %v462, 0
        %485 = vmatprep.subr.bf16.mxu0 0
        %486 = vmatpush1.bf16.msra.mxu0 %v477
        %487 = vmatprep.subr.bf16.mxu0 0
        %488 = vmatpush1.bf16.msra.mxu0 %v478
        %489 = vmatprep.subr.bf16.mxu0 0
        %490 = vmatpush1.bf16.msra.mxu0 0
        %491 = vmatprep.subr.bf16.mxu0 0
        %492 = vmatpush1.bf16.msra.mxu0 0
        %493 = vmatprep.subr.bf16.mxu0 0
        %494 = vmatpush1.bf16.msra.mxu0 0
        %495 = vmatprep.subr.bf16.mxu0 0
        %496 = vmatpush1.bf16.msra.mxu0 0
        %497 = vmatprep.subr.bf16.mxu0 0
        %498 = vmatpush1.bf16.msra.mxu0 0
        %499 = vmatprep.subr.bf16.mxu0 0
        %500 = vmatpush1.bf16.msra.mxu0 0
        %501 = vmatprep.subr.bf16.mxu0 0
        %502 = vmatpush1.bf16.msra.mxu0 0
        %503 = vmatprep.subr.bf16.mxu0 0
        %504 = vmatpush1.bf16.msra.mxu0 0
        %505 = vmatprep.subr.bf16.mxu0 0
        %506 = vmatpush1.bf16.msra.mxu0 0
        %507 = vmatprep.subr.bf16.mxu0 0
        %508 = vmatpush1.bf16.msra.mxu0 0
        %509 = vmatprep.subr.bf16.mxu0 0
        %510 = vmatpush1.bf16.msra.mxu0 0
        %511 = vmatprep.subr.bf16.mxu0 0
        %512 = vmatpush1.bf16.msra.mxu0 0
        %513 = vmatprep.subr.bf16.mxu0 0
        %514 = vmatpush1.bf16.msra.mxu0 0
        %515 = vmatprep.subr.bf16.mxu0 0
        %516 = vmatpush1.bf16.msra.mxu0 0
        %517 = vmatprep.mubr.bf16.mxu0 0
        %518 = vmatmul.mubr.bf16.gmra.mrb[0].mxu0 %v483
        %v519 = vpop.f32.mrb[0].mxu0
        %v520 = vadd.f32 0.0, %v519
        %v521 = vpop.f32.mrb[0].mxu0
        %v522 = vpop.f32.mrb[0].mxu0
        %v523 = vpop.f32.mrb[0].mxu0
        %524 = vdwg.mxu0
        %v525 = vld [vmem:[#allocation10] sm:$0xf]
        %v526 = vld [vmem:[#allocation10 + $0x4] sm:$0xf]
        %v527 = vld [vmem:[#allocation10 + $0x8] sm:$0xf]
        %v528 = vld [vmem:[#allocation10 + $0xc] sm:$0xf]
        %v533 = vunpack.c.l.b16 %v525
        %v534 = vunpack.c.l.b16 %v526
        %v535 = vunpack.c.l.b16 %v527
        %v536 = vunpack.c.l.b16 %v528
        %v537 = vpack.c.b16 %v534, %v533
        %v538 = vpack.c.b16 %v536, %v535
        %v542 = vsel %vm481, %v463, 0
        %544 = vmatprep.subr.bf16.mxu0 0
        %545 = vmatpush1.bf16.msra.mxu0 %v537
        %546 = vmatprep.subr.bf16.mxu0 0
        %547 = vmatpush1.bf16.msra.mxu0 %v538
        %548 = vmatprep.subr.bf16.mxu0 0
        %549 = vmatpush1.bf16.msra.mxu0 0
        %550 = vmatprep.subr.bf16.mxu0 0
        %551 = vmatpush1.bf16.msra.mxu0 0
        %552 = vmatprep.subr.bf16.mxu0 0
        %553 = vmatpush1.bf16.msra.mxu0 0
        %554 = vmatprep.subr.bf16.mxu0 0
        %555 = vmatpush1.bf16.msra.mxu0 0
        %556 = vmatprep.subr.bf16.mxu0 0
        %557 = vmatpush1.bf16.msra.mxu0 0
        %558 = vmatprep.subr.bf16.mxu0 0
        %559 = vmatpush1.bf16.msra.mxu0 0
        %560 = vmatprep.subr.bf16.mxu0 0
        %561 = vmatpush1.bf16.msra.mxu0 0
        %562 = vmatprep.subr.bf16.mxu0 0
        %563 = vmatpush1.bf16.msra.mxu0 0
        %564 = vmatprep.subr.bf16.mxu0 0
        %565 = vmatpush1.bf16.msra.mxu0 0
        %566 = vmatprep.subr.bf16.mxu0 0
        %567 = vmatpush1.bf16.msra.mxu0 0
        %568 = vmatprep.subr.bf16.mxu0 0
        %569 = vmatpush1.bf16.msra.mxu0 0
        %570 = vmatprep.subr.bf16.mxu0 0
        %571 = vmatpush1.bf16.msra.mxu0 0
        %572 = vmatprep.subr.bf16.mxu0 0
        %573 = vmatpush1.bf16.msra.mxu0 0
        %574 = vmatprep.subr.bf16.mxu0 0
        %575 = vmatpush1.bf16.msra.mxu0 0
        %576 = vmatprep.mubr.bf16.mxu0 0
        %577 = vmatmul.mubr.bf16.gmra.mrb[0].mxu0 %v542
        %v578 = vpop.f32.mrb[0].mxu0
        %v579 = vadd.f32 0.0, %v578
        %v580 = vpop.f32.mrb[0].mxu0
        %v581 = vpop.f32.mrb[0].mxu0
        %v582 = vpop.f32.mrb[0].mxu0
        %583 = vdwg.mxu0
        %v584 = vld [vmem:[#allocation11] sm:$0xf]
        %v585 = vld [vmem:[#allocation11 + $0x4] sm:$0xf]
        %v586 = vld [vmem:[#allocation11 + $0x8] sm:$0xf]
        %v587 = vld [vmem:[#allocation11 + $0xc] sm:$0xf]
        %v592 = vunpack.c.l.b16 %v584
        %v593 = vunpack.c.l.b16 %v585
        %v594 = vunpack.c.l.b16 %v586
        %v595 = vunpack.c.l.b16 %v587
        %v596 = vpack.c.b16 %v593, %v592
        %v597 = vpack.c.b16 %v595, %v594
        %v601 = vsel %vm481, %v464, 0
        %603 = vmatprep.subr.bf16.mxu0 0
        %604 = vmatpush1.bf16.msra.mxu0 %v596
        %605 = vmatprep.subr.bf16.mxu0 0
        %606 = vmatpush1.bf16.msra.mxu0 %v597
        %607 = vmatprep.subr.bf16.mxu0 0
        %608 = vmatpush1.bf16.msra.mxu0 0
        %609 = vmatprep.subr.bf16.mxu0 0
        %610 = vmatpush1.bf16.msra.mxu0 0
        %611 = vmatprep.subr.bf16.mxu0 0
        %612 = vmatpush1.bf16.msra.mxu0 0
        %613 = vmatprep.subr.bf16.mxu0 0
        %614 = vmatpush1.bf16.msra.mxu0 0
        %615 = vmatprep.subr.bf16.mxu0 0
        %616 = vmatpush1.bf16.msra.mxu0 0
        %617 = vmatprep.subr.bf16.mxu0 0
        %618 = vmatpush1.bf16.msra.mxu0 0
        %619 = vmatprep.subr.bf16.mxu0 0
        %620 = vmatpush1.bf16.msra.mxu0 0
        %621 = vmatprep.subr.bf16.mxu0 0
        %622 = vmatpush1.bf16.msra.mxu0 0
        %623 = vmatprep.subr.bf16.mxu0 0
        %624 = vmatpush1.bf16.msra.mxu0 0
        %625 = vmatprep.subr.bf16.mxu0 0
        %626 = vmatpush1.bf16.msra.mxu0 0
        %627 = vmatprep.subr.bf16.mxu0 0
        %628 = vmatpush1.bf16.msra.mxu0 0
        %629 = vmatprep.subr.bf16.mxu0 0
        %630 = vmatpush1.bf16.msra.mxu0 0
        %631 = vmatprep.subr.bf16.mxu0 0
        %632 = vmatpush1.bf16.msra.mxu0 0
        %633 = vmatprep.subr.bf16.mxu0 0
        %634 = vmatpush1.bf16.msra.mxu0 0
        %635 = vmatprep.mubr.bf16.mxu0 0
        %636 = vmatmul.mubr.bf16.gmra.mrb[0].mxu0 %v601
        %v637 = vpop.f32.mrb[0].mxu0
        %v638 = vadd.f32 0.0, %v637
        %v639 = vpop.f32.mrb[0].mxu0
        %v640 = vpop.f32.mrb[0].mxu0
        %v641 = vpop.f32.mrb[0].mxu0
        %642 = vdwg.mxu0
        %v643 = vpack.c.bf16 %v520, %v520
        %v644 = vpack.c.bf16 %v579, %v579
        %v645 = vpack.c.bf16 %v638, %v638
        %vm646 = vcmask 64512
        %v648 = vsel %vm646, %v643, 0
        %v651 = vsel %vm646, %v644, 0
        %653 = vmatprep.subr.bf16.mxu0 0
        %654 = vmatpush1.bf16.xpose.msra.mxu0 %v651
        %655 = vmatprep.subr.bf16.mxu0 0
        %656 = vmatpush1.bf16.xpose.msra.mxu0 0
        %657 = vmatprep.subr.bf16.mxu0 0
        %658 = vmatpush1.bf16.xpose.msra.mxu0 0
        %659 = vmatprep.subr.bf16.mxu0 0
        %660 = vmatpush1.bf16.xpose.msra.mxu0 0
        %661 = vmatprep.subr.bf16.mxu0 0
        %662 = vmatpush1.bf16.xpose.msra.mxu0 0
        %663 = vmatprep.subr.bf16.mxu0 0
        %664 = vmatpush1.bf16.xpose.msra.mxu0 0
        %665 = vmatprep.subr.bf16.mxu0 0
        %666 = vmatpush1.bf16.xpose.msra.mxu0 0
        %667 = vmatprep.subr.bf16.mxu0 0
        %668 = vmatpush1.bf16.xpose.msra.mxu0 0
        %669 = vmatprep.subr.bf16.mxu0 0
        %670 = vmatpush1.bf16.xpose.msra.mxu0 0
        %671 = vmatprep.subr.bf16.mxu0 0
        %672 = vmatpush1.bf16.xpose.msra.mxu0 0
        %673 = vmatprep.subr.bf16.mxu0 0
        %674 = vmatpush1.bf16.xpose.msra.mxu0 0
        %675 = vmatprep.subr.bf16.mxu0 0
        %676 = vmatpush1.bf16.xpose.msra.mxu0 0
        %677 = vmatprep.subr.bf16.mxu0 0
        %678 = vmatpush1.bf16.xpose.msra.mxu0 0
        %679 = vmatprep.subr.bf16.mxu0 0
        %680 = vmatpush1.bf16.xpose.msra.mxu0 0
        %681 = vmatprep.subr.bf16.mxu0 0
        %682 = vmatpush1.bf16.xpose.msra.mxu0 0
        %683 = vmatprep.subr.bf16.mxu0 0
        %684 = vmatpush1.bf16.xpose.msra.mxu0 0
        %685 = vmatprep.mubr.bf16.mxu0 0
        %686 = vmatmul.mubr.bf16.gmra.mrb[0].mxu0 %v648
        %v687 = vpop.f32.mrb[0].mxu0
        %v688 = vadd.f32 0.0, %v687
        %v689 = vpop.f32.mrb[0].mxu0
        %v690 = vpop.f32.mrb[0].mxu0
        %v691 = vpop.f32.mrb[0].mxu0
        %692 = vdwg.mxu0
        %v693 = vmul.f32 %v688, 0.35355338
        %v694 = vsel %vm646, %v693, -inf
        %695 = vmax.xlane.f32.xlu0 %v694
        %v696 = vpop.xlane.xlu0 %695
        %v697 = vsub.f32 %v693, %v696
        %v698 = vmul.f32 %v697, 1.442695
        %v699 = vpow.pop %v698
        %v700 = vsel %vm646, %v699, 0.0
        %701 = vadd.xlane.f32.xlu0 %v700
        %v702 = vpop.xlane.xlu0 %701
        %v703 = vrcp.pop %v702
        %v704 = vmul.f32 %v699, %v703
        %705 = vst.msk [vmem:[%s460] sm:$0xff] %vm646, %v704
        %v706 = vpack.c.bf16 %v704, %v704
        %v708 = vsel %vm646, %v706, 0
        %vm710 = vcmask 1043456
        %v712 = vsel %vm710, %v645, 0
        %714 = vmatprep.subr.bf16.mxu0 0
        %715 = vmatpush1.bf16.msra.mxu0 %v712
        %716 = vmatprep.subr.bf16.mxu0 0
        %717 = vmatpush1.bf16.msra.mxu0 0
        %718 = vmatprep.subr.bf16.mxu0 0
        %719 = vmatpush1.bf16.msra.mxu0 0
        %720 = vmatprep.subr.bf16.mxu0 0
        %721 = vmatpush1.bf16.msra.mxu0 0
        %722 = vmatprep.subr.bf16.mxu0 0
        %723 = vmatpush1.bf16.msra.mxu0 0
        %724 = vmatprep.subr.bf16.mxu0 0
        %725 = vmatpush1.bf16.msra.mxu0 0
        %726 = vmatprep.subr.bf16.mxu0 0
        %727 = vmatpush1.bf16.msra.mxu0 0
        %728 = vmatprep.subr.bf16.mxu0 0
        %729 = vmatpush1.bf16.msra.mxu0 0
        %730 = vmatprep.subr.bf16.mxu0 0
        %731 = vmatpush1.bf16.msra.mxu0 0
        %732 = vmatprep.subr.bf16.mxu0 0
        %733 = vmatpush1.bf16.msra.mxu0 0
        %734 = vmatprep.subr.bf16.mxu0 0
        %735 = vmatpush1.bf16.msra.mxu0 0
        %736 = vmatprep.subr.bf16.mxu0 0
        %737 = vmatpush1.bf16.msra.mxu0 0
        %738 = vmatprep.subr.bf16.mxu0 0
        %739 = vmatpush1.bf16.msra.mxu0 0
        %740 = vmatprep.subr.bf16.mxu0 0
        %741 = vmatpush1.bf16.msra.mxu0 0
        %742 = vmatprep.subr.bf16.mxu0 0
        %743 = vmatpush1.bf16.msra.mxu0 0
        %744 = vmatprep.subr.bf16.mxu0 0
        %745 = vmatpush1.bf16.msra.mxu0 0
        %746 = vmatprep.mubr.bf16.mxu0 0
        %747 = vmatmul.mubr.bf16.gmra.mrb[0].mxu0 %v708
        %v748 = vpop.f32.mrb[0].mxu0
        %v749 = vadd.f32 0.0, %v748
        %v750 = vpop.f32.mrb[0].mxu0
        %v751 = vpop.f32.mrb[0].mxu0
        %v752 = vpop.f32.mrb[0].mxu0
        %753 = vdwg.mxu0
        %755 = vrot.lane.b32.xlu0 %v643, 120
        %v756 = vpop.permute.xlu0 %755
        %758 = vrot.lane.b32.xlu0 %v644, 120
        %v759 = vpop.permute.xlu0 %758
        %v761 = vsel %vm646, %v756, 0
        %v764 = vsel %vm646, %v759, 0
        %766 = vmatprep.subr.bf16.mxu0 0
        %767 = vmatpush1.bf16.xpose.msra.mxu0 %v764
        %768 = vmatprep.subr.bf16.mxu0 0
        %769 = vmatpush1.bf16.xpose.msra.mxu0 0
        %770 = vmatprep.subr.bf16.mxu0 0
        %771 = vmatpush1.bf16.xpose.msra.mxu0 0
        %772 = vmatprep.subr.bf16.mxu0 0
        %773 = vmatpush1.bf16.xpose.msra.mxu0 0
        %774 = vmatprep.subr.bf16.mxu0 0
        %775 = vmatpush1.bf16.xpose.msra.mxu0 0
        %776 = vmatprep.subr.bf16.mxu0 0
        %777 = vmatpush1.bf16.xpose.msra.mxu0 0
        %778 = vmatprep.subr.bf16.mxu0 0
        %779 = vmatpush1.bf16.xpose.msra.mxu0 0
        %780 = vmatprep.subr.bf16.mxu0 0
        %781 = vmatpush1.bf16.xpose.msra.mxu0 0
        %782 = vmatprep.subr.bf16.mxu0 0
        %783 = vmatpush1.bf16.xpose.msra.mxu0 0
        %784 = vmatprep.subr.bf16.mxu0 0
        %785 = vmatpush1.bf16.xpose.msra.mxu0 0
        %786 = vmatprep.subr.bf16.mxu0 0
        %787 = vmatpush1.bf16.xpose.msra.mxu0 0
        %788 = vmatprep.subr.bf16.mxu0 0
        %789 = vmatpush1.bf16.xpose.msra.mxu0 0
        %790 = vmatprep.subr.bf16.mxu0 0
        %791 = vmatpush1.bf16.xpose.msra.mxu0 0
        %792 = vmatprep.subr.bf16.mxu0 0
        %793 = vmatpush1.bf16.xpose.msra.mxu0 0
        %794 = vmatprep.subr.bf16.mxu0 0
        %795 = vmatpush1.bf16.xpose.msra.mxu0 0
        %796 = vmatprep.subr.bf16.mxu0 0
        %797 = vmatpush1.bf16.xpose.msra.mxu0 0
        %798 = vmatprep.mubr.bf16.mxu0 0
        %799 = vmatmul.mubr.bf16.gmra.mrb[0].mxu0 %v761
        %v800 = vpop.f32.mrb[0].mxu0
        %v801 = vadd.f32 0.0, %v800
        %v802 = vpop.f32.mrb[0].mxu0
        %v803 = vpop.f32.mrb[0].mxu0
        %v804 = vpop.f32.mrb[0].mxu0
        %805 = vdwg.mxu0
        %v806 = vmul.f32 %v801, 0.35355338
        %v807 = vsel %vm646, %v806, -inf
        %808 = vmax.xlane.f32.xlu0 %v807
        %v809 = vpop.xlane.xlu0 %808
        %v810 = vsub.f32 %v806, %v809
        %v811 = vmul.f32 %v810, 1.442695
        %v812 = vpow.pop %v811
        %v813 = vsel %vm646, %v812, 0.0
        %814 = vadd.xlane.f32.xlu0 %v813
        %v815 = vpop.xlane.xlu0 %814
        %v816 = vrcp.pop %v815
        %v817 = vmul.f32 %v812, %v816
        %s818 = scalar_lea.vmem %s460, 8 [#allocation15]
        %819 = vst.msk [vmem:[%s818] sm:$0xff] %vm646, %v817
        %v820 = vpack.c.bf16 %v817, %v817
        %822 = vrot.lane.b32.xlu0 %v645, 120
        %v823 = vpop.permute.xlu0 %822
        %v825 = vsel %vm646, %v820, 0
        %v828 = vsel %vm710, %v823, 0
        %830 = vmatprep.subr.bf16.mxu0 0
        %831 = vmatpush1.bf16.msra.mxu0 %v828
        %832 = vmatprep.subr.bf16.mxu0 0
        %833 = vmatpush1.bf16.msra.mxu0 0
        %834 = vmatprep.subr.bf16.mxu0 0
        %835 = vmatpush1.bf16.msra.mxu0 0
        %836 = vmatprep.subr.bf16.mxu0 0
        %837 = vmatpush1.bf16.msra.mxu0 0
        %838 = vmatprep.subr.bf16.mxu0 0
        %839 = vmatpush1.bf16.msra.mxu0 0
        %840 = vmatprep.subr.bf16.mxu0 0
        %841 = vmatpush1.bf16.msra.mxu0 0
        %842 = vmatprep.subr.bf16.mxu0 0
        %843 = vmatpush1.bf16.msra.mxu0 0
        %844 = vmatprep.subr.bf16.mxu0 0
        %845 = vmatpush1.bf16.msra.mxu0 0
        %846 = vmatprep.subr.bf16.mxu0 0
        %847 = vmatpush1.bf16.msra.mxu0 0
        %848 = vmatprep.subr.bf16.mxu0 0
        %849 = vmatpush1.bf16.msra.mxu0 0
        %850 = vmatprep.subr.bf16.mxu0 0
        %851 = vmatpush1.bf16.msra.mxu0 0
        %852 = vmatprep.subr.bf16.mxu0 0
        %853 = vmatpush1.bf16.msra.mxu0 0
        %854 = vmatprep.subr.bf16.mxu0 0
        %855 = vmatpush1.bf16.msra.mxu0 0
        %856 = vmatprep.subr.bf16.mxu0 0
        %857 = vmatpush1.bf16.msra.mxu0 0
        %858 = vmatprep.subr.bf16.mxu0 0
        %859 = vmatpush1.bf16.msra.mxu0 0
        %860 = vmatprep.subr.bf16.mxu0 0
        %861 = vmatpush1.bf16.msra.mxu0 0
        %862 = vmatprep.mubr.bf16.mxu0 0
        %863 = vmatmul.mubr.bf16.gmra.mrb[0].mxu0 %v825
        %v864 = vpop.f32.mrb[0].mxu0
        %v865 = vadd.f32 0.0, %v864
        %v866 = vpop.f32.mrb[0].mxu0
        %v867 = vpop.f32.mrb[0].mxu0
        %v868 = vpop.f32.mrb[0].mxu0
        %869 = vdwg.mxu0
        %870 = vrot.lane.b32.xlu0 %v643, 112
        %v871 = vpop.permute.xlu0 %870
        %872 = vrot.lane.b32.xlu0 %v644, 112
        %v873 = vpop.permute.xlu0 %872
        %v875 = vsel %vm646, %v871, 0
        %v878 = vsel %vm646, %v873, 0
        %880 = vmatprep.subr.bf16.mxu0 0
        %881 = vmatpush1.bf16.xpose.msra.mxu0 %v878
        %882 = vmatprep.subr.bf16.mxu0 0
        %883 = vmatpush1.bf16.xpose.msra.mxu0 0
        %884 = vmatprep.subr.bf16.mxu0 0
        %885 = vmatpush1.bf16.xpose.msra.mxu0 0
        %886 = vmatprep.subr.bf16.mxu0 0
        %887 = vmatpush1.bf16.xpose.msra.mxu0 0
        %888 = vmatprep.subr.bf16.mxu0 0
        %889 = vmatpush1.bf16.xpose.msra.mxu0 0
        %890 = vmatprep.subr.bf16.mxu0 0
        %891 = vmatpush1.bf16.xpose.msra.mxu0 0
        %892 = vmatprep.subr.bf16.mxu0 0
        %893 = vmatpush1.bf16.xpose.msra.mxu0 0
        %894 = vmatprep.subr.bf16.mxu0 0
        %895 = vmatpush1.bf16.xpose.msra.mxu0 0
        %896 = vmatprep.subr.bf16.mxu0 0
        %897 = vmatpush1.bf16.xpose.msra.mxu0 0
        %898 = vmatprep.subr.bf16.mxu0 0
        %899 = vmatpush1.bf16.xpose.msra.mxu0 0
        %900 = vmatprep.subr.bf16.mxu0 0
        %901 = vmatpush1.bf16.xpose.msra.mxu0 0
        %902 = vmatprep.subr.bf16.mxu0 0
        %903 = vmatpush1.bf16.xpose.msra.mxu0 0
        %904 = vmatprep.subr.bf16.mxu0 0
        %905 = vmatpush1.bf16.xpose.msra.mxu0 0
        %906 = vmatprep.subr.bf16.mxu0 0
        %907 = vmatpush1.bf16.xpose.msra.mxu0 0
        %908 = vmatprep.subr.bf16.mxu0 0
        %909 = vmatpush1.bf16.xpose.msra.mxu0 0
        %910 = vmatprep.subr.bf16.mxu0 0
        %911 = vmatpush1.bf16.xpose.msra.mxu0 0
        %912 = vmatprep.mubr.bf16.mxu0 0
        %913 = vmatmul.mubr.bf16.gmra.mrb[0].mxu0 %v875
        %v914 = vpop.f32.mrb[0].mxu0
        %v915 = vadd.f32 0.0, %v914
        %v916 = vpop.f32.mrb[0].mxu0
        %v917 = vpop.f32.mrb[0].mxu0
        %v918 = vpop.f32.mrb[0].mxu0
        %919 = vdwg.mxu0
        %v920 = vmul.f32 %v915, 0.35355338
        %v921 = vsel %vm646, %v920, -inf
        %922 = vmax.xlane.f32.xlu0 %v921
        %v923 = vpop.xlane.xlu0 %922
        %v924 = vsub.f32 %v920, %v923
        %v925 = vmul.f32 %v924, 1.442695
        %v926 = vpow.pop %v925
        %v927 = vsel %vm646, %v926, 0.0
        %928 = vadd.xlane.f32.xlu0 %v927
        %v929 = vpop.xlane.xlu0 %928
        %v930 = vrcp.pop %v929
        %v931 = vmul.f32 %v926, %v930
        %s932 = scalar_lea.vmem %s460, 16 [#allocation15]
        %933 = vst.msk [vmem:[%s932] sm:$0xff] %vm646, %v931
        %v934 = vpack.c.bf16 %v931, %v931
        %935 = vrot.lane.b32.xlu0 %v645, 112
        %v936 = vpop.permute.xlu0 %935
        %v938 = vsel %vm646, %v934, 0
        %v941 = vsel %vm710, %v936, 0
        %943 = vmatprep.subr.bf16.mxu0 0
        %944 = vmatpush1.bf16.msra.mxu0 %v941
        %945 = vmatprep.subr.bf16.mxu0 0
        %946 = vmatpush1.bf16.msra.mxu0 0
        %947 = vmatprep.subr.bf16.mxu0 0
        %948 = vmatpush1.bf16.msra.mxu0 0
        %949 = vmatprep.subr.bf16.mxu0 0
        %950 = vmatpush1.bf16.msra.mxu0 0
        %951 = vmatprep.subr.bf16.mxu0 0
        %952 = vmatpush1.bf16.msra.mxu0 0
        %953 = vmatprep.subr.bf16.mxu0 0
        %954 = vmatpush1.bf16.msra.mxu0 0
        %955 = vmatprep.subr.bf16.mxu0 0
        %956 = vmatpush1.bf16.msra.mxu0 0
        %957 = vmatprep.subr.bf16.mxu0 0
        %958 = vmatpush1.bf16.msra.mxu0 0
        %959 = vmatprep.subr.bf16.mxu0 0
        %960 = vmatpush1.bf16.msra.mxu0 0
        %961 = vmatprep.subr.bf16.mxu0 0
        %962 = vmatpush1.bf16.msra.mxu0 0
        %963 = vmatprep.subr.bf16.mxu0 0
        %964 = vmatpush1.bf16.msra.mxu0 0
        %965 = vmatprep.subr.bf16.mxu0 0
        %966 = vmatpush1.bf16.msra.mxu0 0
        %967 = vmatprep.subr.bf16.mxu0 0
        %968 = vmatpush1.bf16.msra.mxu0 0
        %969 = vmatprep.subr.bf16.mxu0 0
        %970 = vmatpush1.bf16.msra.mxu0 0
        %971 = vmatprep.subr.bf16.mxu0 0
        %972 = vmatpush1.bf16.msra.mxu0 0
        %973 = vmatprep.subr.bf16.mxu0 0
        %974 = vmatpush1.bf16.msra.mxu0 0
        %975 = vmatprep.mubr.bf16.mxu0 0
        %976 = vmatmul.mubr.bf16.gmra.mrb[0].mxu0 %v938
        %v977 = vpop.f32.mrb[0].mxu0
        %v978 = vadd.f32 0.0, %v977
        %v979 = vpop.f32.mrb[0].mxu0
        %v980 = vpop.f32.mrb[0].mxu0
        %v981 = vpop.f32.mrb[0].mxu0
        %982 = vdwg.mxu0
        %983 = vrot.lane.b32.xlu0 %v643, 104
        %v984 = vpop.permute.xlu0 %983
        %985 = vrot.lane.b32.xlu0 %v644, 104
        %v986 = vpop.permute.xlu0 %985
        %v988 = vsel %vm646, %v984, 0
        %v991 = vsel %vm646, %v986, 0
        %993 = vmatprep.subr.bf16.mxu0 0
        %994 = vmatpush1.bf16.xpose.msra.mxu0 %v991
        %995 = vmatprep.subr.bf16.mxu0 0
        %996 = vmatpush1.bf16.xpose.msra.mxu0 0
        %997 = vmatprep.subr.bf16.mxu0 0
        %998 = vmatpush1.bf16.xpose.msra.mxu0 0
        %999 = vmatprep.subr.bf16.mxu0 0
        %1000 = vmatpush1.bf16.xpose.msra.mxu0 0
        %1001 = vmatprep.subr.bf16.mxu0 0
        %1002 = vmatpush1.bf16.xpose.msra.mxu0 0
        %1003 = vmatprep.subr.bf16.mxu0 0
        %1004 = vmatpush1.bf16.xpose.msra.mxu0 0
        %1005 = vmatprep.subr.bf16.mxu0 0
        %1006 = vmatpush1.bf16.xpose.msra.mxu0 0
        %1007 = vmatprep.subr.bf16.mxu0 0
        %1008 = vmatpush1.bf16.xpose.msra.mxu0 0
        %1009 = vmatprep.subr.bf16.mxu0 0
        %1010 = vmatpush1.bf16.xpose.msra.mxu0 0
        %1011 = vmatprep.subr.bf16.mxu0 0
        %1012 = vmatpush1.bf16.xpose.msra.mxu0 0
        %1013 = vmatprep.subr.bf16.mxu0 0
        %1014 = vmatpush1.bf16.xpose.msra.mxu0 0
        %1015 = vmatprep.subr.bf16.mxu0 0
        %1016 = vmatpush1.bf16.xpose.msra.mxu0 0
        %1017 = vmatprep.subr.bf16.mxu0 0
        %1018 = vmatpush1.bf16.xpose.msra.mxu0 0
        %1019 = vmatprep.subr.bf16.mxu0 0
        %1020 = vmatpush1.bf16.xpose.msra.mxu0 0
        %1021 = vmatprep.subr.bf16.mxu0 0
        %1022 = vmatpush1.bf16.xpose.msra.mxu0 0
        %1023 = vmatprep.subr.bf16.mxu0 0
        %1024 = vmatpush1.bf16.xpose.msra.mxu0 0
        %1025 = vmatprep.mubr.bf16.mxu0 0
        %1026 = vmatmul.mubr.bf16.gmra.mrb[0].mxu0 %v988
        %v1027 = vpop.f32.mrb[0].mxu0
        %v1028 = vadd.f32 0.0, %v1027
        %v1029 = vpop.f32.mrb[0].mxu0
        %v1030 = vpop.f32.mrb[0].mxu0
        %v1031 = vpop.f32.mrb[0].mxu0
        %1032 = vdwg.mxu0
        %v1033 = vmul.f32 %v1028, 0.35355338
        %v1034 = vsel %vm646, %v1033, -inf
        %1035 = vmax.xlane.f32.xlu0 %v1034
        %v1036 = vpop.xlane.xlu0 %1035
        %v1037 = vsub.f32 %v1033, %v1036
        %v1038 = vmul.f32 %v1037, 1.442695
        %v1039 = vpow.pop %v1038
        %v1040 = vsel %vm646, %v1039, 0.0
        %1041 = vadd.xlane.f32.xlu0 %v1040
        %v1042 = vpop.xlane.xlu0 %1041
        %v1043 = vrcp.pop %v1042
        %v1044 = vmul.f32 %v1039, %v1043
        %s1045 = scalar_lea.vmem %s460, 24 [#allocation15]
        %1046 = vst.msk [vmem:[%s1045] sm:$0xff] %vm646, %v1044
        %v1047 = vpack.c.bf16 %v1044, %v1044
        %1048 = vrot.lane.b32.xlu0 %v645, 104
        %v1049 = vpop.permute.xlu0 %1048
        %v1051 = vsel %vm646, %v1047, 0
        %v1054 = vsel %vm710, %v1049, 0
        %1056 = vmatprep.subr.bf16.mxu0 0
        %1057 = vmatpush1.bf16.msra.mxu0 %v1054
        %1058 = vmatprep.subr.bf16.mxu0 0
        %1059 = vmatpush1.bf16.msra.mxu0 0
        %1060 = vmatprep.subr.bf16.mxu0 0
        %1061 = vmatpush1.bf16.msra.mxu0 0
        %1062 = vmatprep.subr.bf16.mxu0 0
        %1063 = vmatpush1.bf16.msra.mxu0 0
        %1064 = vmatprep.subr.bf16.mxu0 0
        %1065 = vmatpush1.bf16.msra.mxu0 0
        %1066 = vmatprep.subr.bf16.mxu0 0
        %1067 = vmatpush1.bf16.msra.mxu0 0
        %1068 = vmatprep.subr.bf16.mxu0 0
        %1069 = vmatpush1.bf16.msra.mxu0 0
        %1070 = vmatprep.subr.bf16.mxu0 0
        %1071 = vmatpush1.bf16.msra.mxu0 0
        %1072 = vmatprep.subr.bf16.mxu0 0
        %1073 = vmatpush1.bf16.msra.mxu0 0
        %1074 = vmatprep.subr.bf16.mxu0 0
        %1075 = vmatpush1.bf16.msra.mxu0 0
        %1076 = vmatprep.subr.bf16.mxu0 0
        %1077 = vmatpush1.bf16.msra.mxu0 0
        %1078 = vmatprep.subr.bf16.mxu0 0
        %1079 = vmatpush1.bf16.msra.mxu0 0
        %1080 = vmatprep.subr.bf16.mxu0 0
        %1081 = vmatpush1.bf16.msra.mxu0 0
        %1082 = vmatprep.subr.bf16.mxu0 0
        %1083 = vmatpush1.bf16.msra.mxu0 0
        %1084 = vmatprep.subr.bf16.mxu0 0
        %1085 = vmatpush1.bf16.msra.mxu0 0
        %1086 = vmatprep.subr.bf16.mxu0 0
        %1087 = vmatpush1.bf16.msra.mxu0 0
        %1088 = vmatprep.mubr.bf16.mxu0 0
        %1089 = vmatmul.mubr.bf16.gmra.mrb[0].mxu0 %v1051
        %v1090 = vpop.f32.mrb[0].mxu0
        %v1091 = vadd.f32 0.0, %v1090
        %v1092 = vpop.f32.mrb[0].mxu0
        %v1093 = vpop.f32.mrb[0].mxu0
        %v1094 = vpop.f32.mrb[0].mxu0
        %1095 = vdwg.mxu0
        %1097 = vrot.lane.b32.xlu0 %v865, 8
        %v1098 = vpop.permute.xlu0 %1097
        %1101 = vrot.lane.b32.xlu0 %v978, 16
        %v1102 = vpop.permute.xlu0 %1101
        %1105 = vrot.lane.b32.xlu0 %v1091, 24
        %v1106 = vpop.permute.xlu0 %1105
        %v1108 = vsel %vm646, %v749, %v1098
        %vm1109 = vcmask 130048
        %v1110 = vsel %vm1109, %v1108, %v1102
        %vm1111 = vcmask 195584
        %v1112 = vsel %vm1111, %v1110, %v1106
        %v1113 = vpack.c.bf16 %v1112, %v1112
        %v1114 = vld [vmem:[#allocation13] sm:$0xf]
        %v1115 = vld [vmem:[#allocation13 + $0x4] sm:$0xf]
        %v1116 = vld [vmem:[#allocation13 + $0x8] sm:$0xf]
        %v1117 = vld [vmem:[#allocation13 + $0xc] sm:$0xf]
        %v1122 = vunpack.c.l.b16 %v1114
        %v1123 = vunpack.c.l.b16 %v1115
        %v1124 = vunpack.c.l.b16 %v1116
        %v1125 = vunpack.c.l.b16 %v1117
        %v1126 = vpack.c.b16 %v1123, %v1122
        %v1127 = vpack.c.b16 %v1125, %v1124
        %v1131 = vsel %vm481, %v1113, 0
        %1133 = vmatprep.subr.bf16.mxu0 0
        %1134 = vmatpush1.bf16.msra.mxu0 %v1126
        %1135 = vmatprep.subr.bf16.mxu0 0
        %1136 = vmatpush1.bf16.msra.mxu0 %v1127
        %1137 = vmatprep.subr.bf16.mxu0 0
        %1138 = vmatpush1.bf16.msra.mxu0 0
        %1139 = vmatprep.subr.bf16.mxu0 0
        %1140 = vmatpush1.bf16.msra.mxu0 0
        %1141 = vmatprep.subr.bf16.mxu0 0
        %1142 = vmatpush1.bf16.msra.mxu0 0
        %1143 = vmatprep.subr.bf16.mxu0 0
        %1144 = vmatpush1.bf16.msra.mxu0 0
        %1145 = vmatprep.subr.bf16.mxu0 0
        %1146 = vmatpush1.bf16.msra.mxu0 0
        %1147 = vmatprep.subr.bf16.mxu0 0
        %1148 = vmatpush1.bf16.msra.mxu0 0
        %1149 = vmatprep.subr.bf16.mxu0 0
        %1150 = vmatpush1.bf16.msra.mxu0 0
        %1151 = vmatprep.subr.bf16.mxu0 0
        %1152 = vmatpush1.bf16.msra.mxu0 0
        %1153 = vmatprep.subr.bf16.mxu0 0
        %1154 = vmatpush1.bf16.msra.mxu0 0
        %1155 = vmatprep.subr.bf16.mxu0 0
        %1156 = vmatpush1.bf16.msra.mxu0 0
        %1157 = vmatprep.subr.bf16.mxu0 0
        %1158 = vmatpush1.bf16.msra.mxu0 0
        %1159 = vmatprep.subr.bf16.mxu0 0
        %1160 = vmatpush1.bf16.msra.mxu0 0
        %1161 = vmatprep.subr.bf16.mxu0 0
        %1162 = vmatpush1.bf16.msra.mxu0 0
        %1163 = vmatprep.subr.bf16.mxu0 0
        %1164 = vmatpush1.bf16.msra.mxu0 0
        %1165 = vmatprep.mubr.bf16.mxu0 0
        %1166 = vmatmul.mubr.bf16.gmra.mrb[0].mxu0 %v1131
        %v1167 = vpop.f32.mrb[0].mxu0
        %v1168 = vadd.f32 0.0, %v1167
        %v1169 = vpop.f32.mrb[0].mxu0
        %v1170 = vpop.f32.mrb[0].mxu0
        %v1171 = vpop.f32.mrb[0].mxu0
        %1172 = vdwg.mxu0
        %1173 = vst.msk [vmem:[%s453] sm:$0xff] %vm481, %v1168
        %s1174 = sand.u32 %s204, 1
        %s1175 = scalar_lea.sflag [#allocation4], %s1174
        %s1176 = sand.u32 %s204, 1
        %s1177 = smul.addr %s1176, 8
        %s1178 = scalar_lea.vmem [#allocation14], %s1177
        %s1179 = sand.u32 %s230, 1
        %s1180 = scalar_lea.sflag [#allocation16], %s1179
        %s1181 = sand.u32 %s230, 1
        %s1182 = smul.addr %s1181, 32
        %s1183 = scalar_lea.vmem [#allocation15], %s1182
        // Predicated region
        $region77: #{tpu_custom_call.1} parent=47 // pred_check
          %p1184 = pneg %p214
        $region78: #{tpu_custom_call.1} parent=47 // pred_check_branch
          %1186 = sbr.rel (%p1184) target = $region80
        $region79: #{tpu_custom_call.1} parent=47 // pred_region
          %s1188 = ssub.s32 128, 128
          %1189 = vsyncadd %s1175, %s1188
          %s1190 = smul.addr %s34, 128
          %s1191 = scalar_lea.hbm %s7, %s1190
          %s1193 = sshll.u32 %s1178, 4
          %s1194 = int_to_ptr.vmem [resolvable:$true] %s1193
          %1196 = dma.vmem_to_hbm [thread:$0]  %s1194, 128, %s1191, %s1175
        $region80: #{tpu_custom_call.1} parent=47 // pred_fallthru
          _
        // Predicated region
        $region81: #{tpu_custom_call.1} parent=47 // pred_check
          %p1197 = pneg %p240
        $region82: #{tpu_custom_call.1} parent=47 // pred_check_branch
          %1199 = sbr.rel (%p1197) target = $region84
        $region83: #{tpu_custom_call.1} parent=47 // pred_region
          %s1201 = ssub.s32 512, 512
          %1202 = vsyncadd %s1180, %s1201
          %s1203 = smul.addr %s34, 128
          %s1204 = scalar_lea.hbm %s8, %s1203
          %s1205 = sshll.u32 %s1183, 4
          %s1206 = int_to_ptr.vmem [resolvable:$true] %s1205
          %1211 = dma.vmem_to_hbm [thread:$0]  %s1206, 512, %s1204, %s1180, 128, 256, 8
        $region84: #{tpu_custom_call.1} parent=47 // pred_fallthru
          _
      $region48: #{tpu_custom_call.1} parent=5 // pred_fallthru
        _
      %p1212 = scmp.le.s32.totalorder 2, %s29
      // Predicated region
      $region85: #{tpu_custom_call.1} parent=5 // pred_check
        %p1213 = pneg %p1212
      $region86: #{tpu_custom_call.1} parent=5 // pred_check_branch
        %1215 = sbr.rel (%p1213) target = $region88
      $region87: #{tpu_custom_call.1} parent=5 // pred_region
        %s1216 = ssub.s32 %s29, 2
        // Predicated region
        $region89: #{tpu_custom_call.1} parent=87 // pred_check
          %p1217 = pneg %p220
        $region90: #{tpu_custom_call.1} parent=87 // pred_check_branch
          %1219 = sbr.rel (%p1217) target = $region92
        $region91: #{tpu_custom_call.1} parent=87 // pred_region
          %s1220 = sand.u32 %s205, 1
          %s1221 = scalar_lea.sflag [#allocation4], %s1220
          %s1222 = sand.u32 %s205, 1
          %s1223 = smul.addr %s1222, 8
          %s1224 = scalar_lea.vmem [#allocation14], %s1223
          %1225 = dma.done %s1221, 128
        $region92: #{tpu_custom_call.1} parent=87 // pred_fallthru
          _
        // Predicated region
        $region93: #{tpu_custom_call.1} parent=87 // pred_check
          %p1226 = pneg %p246
        $region94: #{tpu_custom_call.1} parent=87 // pred_check_branch
          %1228 = sbr.rel (%p1226) target = $region96
        $region95: #{tpu_custom_call.1} parent=87 // pred_region
          %s1229 = sand.u32 %s231, 1
          %s1230 = scalar_lea.sflag [#allocation16], %s1229
          %s1231 = sand.u32 %s231, 1
          %s1232 = smul.addr %s1231, 32
          %s1233 = scalar_lea.vmem [#allocation15], %s1232
          %1234 = dma.done %s1230, 512
        $region96: #{tpu_custom_call.1} parent=87 // pred_fallthru
          _
      $region88: #{tpu_custom_call.1} parent=5 // pred_fallthru
        _
    $region6: #{tpu_custom_call.1} parent=1 // loop_footer
      %s33 = sadd.s32 1, %s29
    $region7: #{tpu_custom_call.1} parent=1 // loop_footer_branch
      %28 = sbr.rel target = $region3
    $region8: #{tpu_custom_call.1} parent=1 // loop_exit
      _
    %1235 = vsyncpa [#allocation3], 1
    %s1236 = scalar_lea.sflag [#allocation3], 1
    %1237 = vsyncpa %s1236, 1
    %1238 = vsyncpa [#allocation6], 1
    %s1239 = scalar_lea.sflag [#allocation6], 1
    %1240 = vsyncpa %s1239, 1
    %1241 = vsyncpa [#allocation9], 1
    %1242 = vsyncpa [#allocation12], 1
    %1243 = vsyncpa [#allocation4], 1
    %s1244 = scalar_lea.sflag [#allocation4], 1
    %1245 = vsyncpa %s1244, 1
    %1246 = vsyncpa [#allocation16], 1
    %s1247 = scalar_lea.sflag [#allocation16], 1
    %1248 = vsyncpa %s1247, 1

</llo_original>
